<compile_context>
chip_gen: v6e
topology: v6e:2x2x1
jax: 0.10.0
libtpu: 0.0.40
codegen_flags: <defaults>
</compile_context>

<pallas_src>
import jax
import jax.numpy as jnp
from jax.experimental import pallas as pl
from jax.experimental.pallas import tpu as pltpu

# ---- config (mirrors DrugNet __init__ at small scale) ----
IN_CHANNELS = 8      # in_channels
CHANNELS    = 32     # args.channels
NUM_UNIT    = 2      # args.num_unit (GNN layers)
NUM_CLASSES = 2
NUM_NODES   = 16     # nodes per graph-block
NUM_GRAPHS  = 2      # graphs per graph-block (global_max_pool segments)
NUM_BLOCKS  = 8      # total graph-blocks in the batch
BLOCKS_PER_STEP = 4  # graph-blocks stacked per grid step
C_PAD       = 128    # lane-padded feature width (covers Cin=8, C=32, 2C=64, classes=2)

NUM_STEPS = NUM_BLOCKS // BLOCKS_PER_STEP       # 2  (multiple of 2 -> both v7x TCs busy)
N_STEP    = BLOCKS_PER_STEP * NUM_NODES         # 64 stacked node rows per step
B_STEP    = BLOCKS_PER_STEP * NUM_GRAPHS        # 8  graphs per step -> (8,128) out tile
NEG_INF   = -1e30


def drugnet_forward_kernel(adj_ref, x_ref, batch_ref, w_ref, b_ref, out_ref, g_sc):
    """One grid step = BLOCKS_PER_STEP stacked graph-blocks (N_STEP nodes, B_STEP graphs).

    adj_ref  : (1, N_STEP, N_STEP) bf16  block-diagonal GCN-normalized adjacency
    x_ref    : (1, N_STEP, C_PAD)  bf16  zero-padded stacked node features
    batch_ref: (1, N_STEP, 1)      int32 graph id (0..B_STEP-1) per node (sublane layout)
    w_ref    : (4, C_PAD, C_PAD)   bf16  packed weights [W1, W2, Wm1, Wm2] (zero padded)
    b_ref    : (4, 1, C_PAD)       f32   packed biases  [b1, b2, bm1, bm2] (zero padded)
    out_ref  : (1, B_STEP, C_PAD)  f32   lane-dense logits slab (first NUM_CLASSES valid)
    g_sc     : (B_STEP, C_PAD)     f32   VMEM scratch for pooled graph reps
    """
    adj  = adj_ref[0]                      # (N_STEP, N_STEP) bf16
    h_bf = x_ref[0]                        # (N_STEP, C_PAD)  bf16
    bids = batch_ref[0]                    # (N_STEP, 1)      int32

    # --- gnn_model: NUM_UNIT GCN-style layers  H <- ReLU((Â H) W + b) ---
    node_rep = None
    for layer in range(NUM_UNIT):
        ah = jnp.dot(adj, h_bf, preferred_element_type=jnp.float32)       # (N_STEP,C_PAD)
        z = jnp.dot(ah.astype(jnp.bfloat16), w_ref[layer],
                    preferred_element_type=jnp.float32) + b_ref[layer]
        node_rep = jnp.maximum(z, 0.0)                                    # f32 ReLU (VPU)
        h_bf = node_rep.astype(jnp.bfloat16)

    # --- global_max_pool(node_rep, batch): per-graph masked max (VPU select + XLU reduce)
    # bids already has the node dim in sublanes, so no lane->sublane relayout is needed.
    # TODO(synk): an empty graph segment pools to -1e30 (PyG scatter-max is also
    # undefined there); all graphs here are non-empty.
    for b in range(B_STEP):
        member = bids == b                                   # (N_STEP, 1) bool
        masked = jnp.where(member, node_rep, NEG_INF)        # (N_STEP, C_PAD) f32
        g_sc[pl.ds(b, 1), :] = jnp.max(masked, axis=0, keepdims=True)
    g = g_sc[...]                                            # (B_STEP, C_PAD) graph_rep

    # --- out_mlp: Linear(C, 2C) -> ReLU -> Linear(2C, num_classes) ---
    z = jnp.dot(g.astype(jnp.bfloat16), w_ref[NUM_UNIT],
                preferred_element_type=jnp.float32) + b_ref[NUM_UNIT]
    z = jnp.maximum(z, 0.0)
    out = jnp.dot(z.astype(jnp.bfloat16), w_ref[NUM_UNIT + 1],
                  preferred_element_type=jnp.float32) + b_ref[NUM_UNIT + 1]
    out_ref[0] = out                                         # (8,128) unmasked vreg store


def build_params(key):
    """Deterministic parameter init matching the module's layer shapes."""
    ks = jax.random.split(key, 8)
    s = 0.1
    w1 = (jax.random.normal(ks[0], (IN_CHANNELS, CHANNELS)) * s).astype(jnp.float32)
    b1 = jnp.zeros((CHANNELS,), jnp.float32)
    w2 = (jax.random.normal(ks[1], (CHANNELS, CHANNELS)) * s).astype(jnp.float32)
    b2 = jnp.zeros((CHANNELS,), jnp.float32)
    wm1 = (jax.random.normal(ks[2], (CHANNELS, 2 * CHANNELS)) * s).astype(jnp.float32)
    bm1 = (jax.random.normal(ks[3], (2 * CHANNELS,)) * s).astype(jnp.float32)
    wm2 = (jax.random.normal(ks[4], (2 * CHANNELS, NUM_CLASSES)) * s).astype(jnp.float32)
    bm2 = (jax.random.normal(ks[5], (NUM_CLASSES,)) * s).astype(jnp.float32)
    return (w1, b1, w2, b2, wm1, bm1, wm2, bm2)


def pack_params(params):
    """Pad every weight/bias to 128 lanes and pack into two VMEM slabs (2 DMAs total)."""
    w1, b1, w2, b2, wm1, bm1, wm2, bm2 = params

    def pad_w(w):
        r, c = w.shape
        return jnp.zeros((C_PAD, C_PAD), jnp.float32).at[:r, :c].set(w)

    def pad_b(b):
        return jnp.zeros((C_PAD,), jnp.float32).at[:b.shape[0]].set(b)

    w_slab = jnp.stack([pad_w(w1), pad_w(w2), pad_w(wm1), pad_w(wm2)]).astype(jnp.bfloat16)
    b_slab = jnp.stack([pad_b(b1), pad_b(b2), pad_b(bm1), pad_b(bm2)])[:, None, :]
    return w_slab, b_slab.astype(jnp.float32)          # (4,128,128) bf16, (4,1,128) f32


def normalized_adjacency(edge_index, num_nodes):
    """Dense GCN-normalized adjacency D^-1/2 (A + I) D^-1/2 for one block (plain-JAX glue).

    Self-loop safe: the diagonal is forced to exactly 1 even if edge_index already
    contains self-loops. Multi-edges are deduplicated (binary adjacency).
    """
    src, dst = edge_index[0], edge_index[1]
    a = jnp.zeros((num_nodes, num_nodes), jnp.float32)
    a = a.at[dst, src].max(1.0)                     # binary adjacency (dedup multi-edges)
    a = jnp.maximum(a, a.T)                         # undirected
    eye = jnp.eye(num_nodes, dtype=jnp.float32)
    a = jnp.where(eye > 0, 1.0, a)                  # A + I with diag forced to exactly 1
    deg = jnp.sum(a, axis=1)
    dinv = jnp.where(deg > 0, 1.0 / jnp.sqrt(deg), 0.0)
    return a * dinv[:, None] * dinv[None, :]


def block_diagonal(blocks):
    """(S, K, N, N) per-block adjacencies -> (S, K*N, K*N) block-diagonal per step."""
    s, k, n, _ = blocks.shape
    out = jnp.zeros((s, k * n, k * n), blocks.dtype)
    for i in range(k):
        out = out.at[:, i * n:(i + 1) * n, i * n:(i + 1) * n].set(blocks[:, i])
    return out


def drugnet_forward(x, edge_index, edge_attr, batch, params):
    """Forward over NUM_BLOCKS graph-blocks, stacked BLOCKS_PER_STEP per grid step.

    x          : (G, N, Cin) node features per block
    edge_index : (G, 2, E)   COO edges per block
    edge_attr  : unused by the GCN-style backbone (see TODO above)
    batch      : (G, N)      graph id (0..NUM_GRAPHS-1) per node within each block
    returns    : (G * NUM_GRAPHS, NUM_CLASSES) logits
    """
    del edge_attr
    G = x.shape[0]
    assert G == NUM_BLOCKS and G % BLOCKS_PER_STEP == 0

    # Host-side glue: block-diagonal normalized adjacency, stacked padded features,
    # per-step global graph ids.
    adj = jax.vmap(lambda ei: normalized_adjacency(ei, NUM_NODES))(edge_index)
    adj = block_diagonal(adj.reshape(NUM_STEPS, BLOCKS_PER_STEP, NUM_NODES, NUM_NODES))
    adj = adj.astype(jnp.bfloat16)                                  # (S, N_STEP, N_STEP)

    x_pad = jnp.pad(x.astype(jnp.float32),
                    ((0, 0), (0, 0), (0, C_PAD - IN_CHANNELS)))
    x_pad = x_pad.reshape(NUM_STEPS, N_STEP, C_PAD).astype(jnp.bfloat16)

    offs = (jnp.arange(BLOCKS_PER_STEP, dtype=jnp.int32) * NUM_GRAPHS)[None, :, None]
    batch_step = (batch.reshape(NUM_STEPS, BLOCKS_PER_STEP, NUM_NODES).astype(jnp.int32)
                  + offs).reshape(NUM_STEPS, N_STEP, 1)             # (S, N_STEP, 1) int32

    w_slab, b_slab = pack_params(params)

    grid_spec = pltpu.PrefetchScalarGridSpec(
        num_scalar_prefetch=0,
        grid=(NUM_STEPS,),
        in_specs=[
            pl.BlockSpec((1, N_STEP, N_STEP), lambda s: (s, 0, 0)),   # block-diag adj
            pl.BlockSpec((1, N_STEP, C_PAD),  lambda s: (s, 0, 0)),   # stacked features
            pl.BlockSpec((1, N_STEP, 1),      lambda s: (s, 0, 0)),   # graph ids (sublanes)
            pl.BlockSpec((4, C_PAD, C_PAD),   lambda s: (0, 0, 0)),   # weight slab (invariant)
            pl.BlockSpec((4, 1, C_PAD),       lambda s: (0, 0, 0)),   # bias slab (invariant)
        ],
        out_specs=pl.BlockSpec((1, B_STEP, C_PAD), lambda s: (s, 0, 0)),
        scratch_shapes=[pltpu.VMEM((B_STEP, C_PAD), jnp.float32)],
    )

    fwd = pl.pallas_call(
        drugnet_forward_kernel,
        out_shape=jax.ShapeDtypeStruct((NUM_STEPS, B_STEP, C_PAD), jnp.float32),
        grid_spec=grid_spec,
        compiler_params=pltpu.CompilerParams(
            dimension_semantics=("parallel",)),     # 2 steps -> both TCs on v7x
    )
    out_pad = fwd(adj, x_pad, batch_step, w_slab, b_slab)           # (S, B_STEP, 128)
    return out_pad.reshape(NUM_STEPS * B_STEP, C_PAD)[:, :NUM_CLASSES]


if __name__ == "__main__":
    key = jax.random.PRNGKey(0)
    kx, ke, kp = jax.random.split(key, 3)

    # Node features: NUM_BLOCKS graph-blocks, 16 nodes x 8 channels each.
    x = jax.random.normal(kx, (NUM_BLOCKS, NUM_NODES, IN_CHANNELS), jnp.float32)

    # Random sparse edges (COO, G x 2 x E), edge_attr placeholder, graph assignment.
    E = 40
    src = jax.random.randint(ke, (NUM_BLOCKS, E), 0, NUM_NODES)
    dst = jax.random.randint(jax.random.fold_in(ke, 1), (NUM_BLOCKS, E), 0, NUM_NODES)
    edge_index = jnp.stack([src, dst], axis=1)                    # (G, 2, E)
    edge_attr = jnp.ones((NUM_BLOCKS, E, 4), jnp.float32)         # unused by backbone
    batch_one = jnp.concatenate([jnp.zeros((NUM_NODES // 2,), jnp.int32),
                                 jnp.ones((NUM_NODES - NUM_NODES // 2,), jnp.int32)])
    batch = jnp.tile(batch_one[None, :], (NUM_BLOCKS, 1))         # (G, N)

    params = build_params(kp)

    logits = jax.jit(drugnet_forward)(x, edge_index, edge_attr, batch, params)
    jax.block_until_ready(logits)
    assert logits.shape == (NUM_BLOCKS * NUM_GRAPHS, NUM_CLASSES)
    assert bool(jnp.all(jnp.isfinite(logits)))
    print("KERNEL_OK")
</pallas_src>

<mosaic_0001>
module attributes {stable_mosaic.version = 11 : i64} {
  func.func private @main(%arg0: i32) attributes {dimension_semantics = [#tpu.dimension_semantics<core_parallel>], iteration_bounds = array<i64: 2>, tpu.core_type = #tpu.core_type<sc_scalar_subcore>, window_params = []} {
    return
  }
}

module attributes {stable_mosaic.version = 11 : i64} {
  func.func private @main(%arg0: i32) attributes {dimension_semantics = [#tpu.dimension_semantics<core_parallel>], iteration_bounds = array<i64: 2>, tpu.core_type = #tpu.core_type<sc_scalar_subcore>, window_params = []} {
    return
  }
}

module attributes {stable_mosaic.version = 11 : i64} {
  func.func @drugnet_forward_kernel(%arg0: i32, %arg1: memref<1x64x64xbf16, #tpu.memory_space<vmem>>, %arg2: memref<1x64x128xbf16, #tpu.memory_space<vmem>>, %arg3: memref<1x64x1xi32, #tpu.memory_space<vmem>>, %arg4: memref<4x128x128xbf16, #tpu.memory_space<vmem>>, %arg5: memref<4x1x128xf32, #tpu.memory_space<vmem>>, %arg6: memref<1x8x128xf32, #tpu.memory_space<vmem>>, %arg7: memref<8x128xf32, #tpu.memory_space<vmem>>) attributes {dimension_semantics = [#tpu.dimension_semantics<parallel>], iteration_bounds = array<i64: 2>, scalar_prefetch = 0 : i64, scratch_operands = 1 : i64, tpu.core_type = #tpu.core_type<tc>, window_params = [{transform_indices = @transform_0, window_bounds = array<i64: 1, 64, 64>}, {transform_indices = @transform_1, window_bounds = array<i64: 1, 64, 128>}, {transform_indices = @transform_2, window_bounds = array<i64: 1, 64, 1>}, {pipeline_mode = #tpu.pipeline_mode<synchronous>, transform_indices = @transform_3, window_bounds = array<i64: 4, 128, 128>}, {pipeline_mode = #tpu.pipeline_mode<synchronous>, transform_indices = @transform_4, window_bounds = array<i64: 4, 1, 128>}, {transform_indices = @transform_5, window_bounds = array<i64: 1, 8, 128>}]} {
    %c0 = arith.constant 0 : index
    %c0_0 = arith.constant 0 : index
    %c0_1 = arith.constant 0 : index
    %0 = vector.load %arg1[%c0, %c0_0, %c0_1] : memref<1x64x64xbf16, #tpu.memory_space<vmem>>, vector<1x64x64xbf16>
    %1 = vector.shape_cast %0 : vector<1x64x64xbf16> to vector<64x64xbf16>
    %c0_2 = arith.constant 0 : index
    %c0_3 = arith.constant 0 : index
    %c0_4 = arith.constant 0 : index
    %2 = vector.load %arg2[%c0_2, %c0_3, %c0_4] : memref<1x64x128xbf16, #tpu.memory_space<vmem>>, vector<1x64x128xbf16>
    %3 = vector.shape_cast %2 : vector<1x64x128xbf16> to vector<64x128xbf16>
    %c0_5 = arith.constant 0 : index
    %c0_6 = arith.constant 0 : index
    %c0_7 = arith.constant 0 : index
    %4 = vector.load %arg3[%c0_5, %c0_6, %c0_7] : memref<1x64x1xi32, #tpu.memory_space<vmem>>, vector<1x64x1xi32>
    %5 = vector.shape_cast %4 : vector<1x64x1xi32> to vector<64x1xi32>
    %cst = arith.constant dense<0.000000e+00> : vector<64x128xf32>
    %6 = tpu.matmul %1, %3, %cst {dimension_numbers = #tpu.dot_dimension_numbers<[1], [0], [0], [1], [0, 0, 1, 1], [], []>} : vector<64x64xbf16>, vector<64x128xbf16>, vector<64x128xf32> -> vector<64x128xf32>
    %7 = arith.truncf %6 : vector<64x128xf32> to vector<64x128xbf16>
    %c0_8 = arith.constant 0 : index
    %c0_9 = arith.constant 0 : index
    %c0_10 = arith.constant 0 : index
    %8 = vector.load %arg4[%c0_8, %c0_9, %c0_10] : memref<4x128x128xbf16, #tpu.memory_space<vmem>>, vector<1x128x128xbf16>
    %9 = vector.shape_cast %8 : vector<1x128x128xbf16> to vector<128x128xbf16>
    %cst_11 = arith.constant dense<0.000000e+00> : vector<64x128xf32>
    %10 = tpu.matmul %7, %9, %cst_11 {dimension_numbers = #tpu.dot_dimension_numbers<[1], [0], [0], [1], [0, 0, 1, 1], [], []>} : vector<64x128xbf16>, vector<128x128xbf16>, vector<64x128xf32> -> vector<64x128xf32>
    %c0_12 = arith.constant 0 : index
    %c0_13 = arith.constant 0 : index
    %c0_14 = arith.constant 0 : index
    %11 = vector.load %arg5[%c0_12, %c0_13, %c0_14] : memref<4x1x128xf32, #tpu.memory_space<vmem>>, vector<1x1x128xf32>
    %12 = vector.shape_cast %11 : vector<1x1x128xf32> to vector<1x128xf32>
    %13 = vector.broadcast %12 : vector<1x128xf32> to vector<64x128xf32>
    %14 = arith.addf %10, %13 : vector<64x128xf32>
    %cst_15 = arith.constant 0.000000e+00 : f32
    %15 = vector.broadcast %cst_15 : f32 to vector<64x128xf32>
    %16 = arith.maximumf %14, %15 : vector<64x128xf32>
    %17 = arith.truncf %16 : vector<64x128xf32> to vector<64x128xbf16>
    %cst_16 = arith.constant dense<0.000000e+00> : vector<64x128xf32>
    %18 = tpu.matmul %1, %17, %cst_16 {dimension_numbers = #tpu.dot_dimension_numbers<[1], [0], [0], [1], [0, 0, 1, 1], [], []>} : vector<64x64xbf16>, vector<64x128xbf16>, vector<64x128xf32> -> vector<64x128xf32>
    %19 = arith.truncf %18 : vector<64x128xf32> to vector<64x128xbf16>
    %c1 = arith.constant 1 : index
    %c0_17 = arith.constant 0 : index
    %c0_18 = arith.constant 0 : index
    %20 = vector.load %arg4[%c1, %c0_17, %c0_18] : memref<4x128x128xbf16, #tpu.memory_space<vmem>>, vector<1x128x128xbf16>
    %21 = vector.shape_cast %20 : vector<1x128x128xbf16> to vector<128x128xbf16>
    %cst_19 = arith.constant dense<0.000000e+00> : vector<64x128xf32>
    %22 = tpu.matmul %19, %21, %cst_19 {dimension_numbers = #tpu.dot_dimension_numbers<[1], [0], [0], [1], [0, 0, 1, 1], [], []>} : vector<64x128xbf16>, vector<128x128xbf16>, vector<64x128xf32> -> vector<64x128xf32>
    %c1_20 = arith.constant 1 : index
    %c0_21 = arith.constant 0 : index
    %c0_22 = arith.constant 0 : index
    %23 = vector.load %arg5[%c1_20, %c0_21, %c0_22] : memref<4x1x128xf32, #tpu.memory_space<vmem>>, vector<1x1x128xf32>
    %24 = vector.shape_cast %23 : vector<1x1x128xf32> to vector<1x128xf32>
    %25 = vector.broadcast %24 : vector<1x128xf32> to vector<64x128xf32>
    %26 = arith.addf %22, %25 : vector<64x128xf32>
    %cst_23 = arith.constant 0.000000e+00 : f32
    %27 = vector.broadcast %cst_23 : f32 to vector<64x128xf32>
    %28 = arith.maximumf %26, %27 : vector<64x128xf32>
    %c0_i32 = arith.constant 0 : i32
    %29 = vector.broadcast %c0_i32 : i32 to vector<64x1xi32>
    %30 = arith.cmpi eq, %5, %29 : vector<64x1xi32>
    %cst_24 = arith.constant -1.000000e+30 : f32
    %31 = vector.shape_cast %30 : vector<64x1xi1> to vector<64x1xi1>
    %32 = vector.broadcast %31 : vector<64x1xi1> to vector<64x128xi1>
    %33 = vector.broadcast %cst_24 : f32 to vector<64x128xf32>
    %34 = arith.select %32, %28, %33 : vector<64x128xi1>, vector<64x128xf32>
    %cst_25 = arith.constant dense<0xFF800000> : vector<128xf32>
    %35 = vector.multi_reduction <maximumf>, %34, %cst_25 [0] : vector<64x128xf32> to vector<128xf32>
    %36 = vector.shape_cast %35 : vector<128xf32> to vector<1x128xf32>
    %c0_26 = arith.constant 0 : index
    %c0_27 = arith.constant 0 : index
    %37 = vector.load %arg7[%c0_26, %c0_27] : memref<8x128xf32, #tpu.memory_space<vmem>>, vector<1x128xf32>
    tpu.vector_store %arg7[%c0_26, %c0_27], %36 {strides = array<i32>} : memref<8x128xf32, #tpu.memory_space<vmem>>, vector<1x128xf32>,
    %c1_i32 = arith.constant 1 : i32
    %38 = vector.broadcast %c1_i32 : i32 to vector<64x1xi32>
    %39 = arith.cmpi eq, %5, %38 : vector<64x1xi32>
    %cst_28 = arith.constant -1.000000e+30 : f32
    %40 = vector.shape_cast %39 : vector<64x1xi1> to vector<64x1xi1>
    %41 = vector.broadcast %40 : vector<64x1xi1> to vector<64x128xi1>
    %42 = vector.broadcast %cst_28 : f32 to vector<64x128xf32>
    %43 = arith.select %41, %28, %42 : vector<64x128xi1>, vector<64x128xf32>
    %cst_29 = arith.constant dense<0xFF800000> : vector<128xf32>
    %44 = vector.multi_reduction <maximumf>, %43, %cst_29 [0] : vector<64x128xf32> to vector<128xf32>
    %45 = vector.shape_cast %44 : vector<128xf32> to vector<1x128xf32>
    %c1_30 = arith.constant 1 : index
    %c0_31 = arith.constant 0 : index
    %46 = vector.load %arg7[%c1_30, %c0_31] : memref<8x128xf32, #tpu.memory_space<vmem>>, vector<1x128xf32>
    tpu.vector_store %arg7[%c1_30, %c0_31], %45 {strides = array<i32>} : memref<8x128xf32, #tpu.memory_space<vmem>>, vector<1x128xf32>,
    %c2_i32 = arith.constant 2 : i32
    %47 = vector.broadcast %c2_i32 : i32 to vector<64x1xi32>
    %48 = arith.cmpi eq, %5, %47 : vector<64x1xi32>
    %cst_32 = arith.constant -1.000000e+30 : f32
    %49 = vector.shape_cast %48 : vector<64x1xi1> to vector<64x1xi1>
    %50 = vector.broadcast %49 : vector<64x1xi1> to vector<64x128xi1>
    %51 = vector.broadcast %cst_32 : f32 to vector<64x128xf32>
    %52 = arith.select %50, %28, %51 : vector<64x128xi1>, vector<64x128xf32>
    %cst_33 = arith.constant dense<0xFF800000> : vector<128xf32>
    %53 = vector.multi_reduction <maximumf>, %52, %cst_33 [0] : vector<64x128xf32> to vector<128xf32>
    %54 = vector.shape_cast %53 : vector<128xf32> to vector<1x128xf32>
    %c2 = arith.constant 2 : index
    %c0_34 = arith.constant 0 : index
    %55 = vector.load %arg7[%c2, %c0_34] : memref<8x128xf32, #tpu.memory_space<vmem>>, vector<1x128xf32>
    tpu.vector_store %arg7[%c2, %c0_34], %54 {strides = array<i32>} : memref<8x128xf32, #tpu.memory_space<vmem>>, vector<1x128xf32>,
    %c3_i32 = arith.constant 3 : i32
    %56 = vector.broadcast %c3_i32 : i32 to vector<64x1xi32>
    %57 = arith.cmpi eq, %5, %56 : vector<64x1xi32>
    %cst_35 = arith.constant -1.000000e+30 : f32
    %58 = vector.shape_cast %57 : vector<64x1xi1> to vector<64x1xi1>
    %59 = vector.broadcast %58 : vector<64x1xi1> to vector<64x128xi1>
    %60 = vector.broadcast %cst_35 : f32 to vector<64x128xf32>
    %61 = arith.select %59, %28, %60 : vector<64x128xi1>, vector<64x128xf32>
    %cst_36 = arith.constant dense<0xFF800000> : vector<128xf32>
    %62 = vector.multi_reduction <maximumf>, %61, %cst_36 [0] : vector<64x128xf32> to vector<128xf32>
    %63 = vector.shape_cast %62 : vector<128xf32> to vector<1x128xf32>
    %c3 = arith.constant 3 : index
    %c0_37 = arith.constant 0 : index
    %64 = vector.load %arg7[%c3, %c0_37] : memref<8x128xf32, #tpu.memory_space<vmem>>, vector<1x128xf32>
    tpu.vector_store %arg7[%c3, %c0_37], %63 {strides = array<i32>} : memref<8x128xf32, #tpu.memory_space<vmem>>, vector<1x128xf32>,
    %c4_i32 = arith.constant 4 : i32
    %65 = vector.broadcast %c4_i32 : i32 to vector<64x1xi32>
    %66 = arith.cmpi eq, %5, %65 : vector<64x1xi32>
    %cst_38 = arith.constant -1.000000e+30 : f32
    %67 = vector.shape_cast %66 : vector<64x1xi1> to vector<64x1xi1>
    %68 = vector.broadcast %67 : vector<64x1xi1> to vector<64x128xi1>
    %69 = vector.broadcast %cst_38 : f32 to vector<64x128xf32>
    %70 = arith.select %68, %28, %69 : vector<64x128xi1>, vector<64x128xf32>
    %cst_39 = arith.constant dense<0xFF800000> : vector<128xf32>
    %71 = vector.multi_reduction <maximumf>, %70, %cst_39 [0] : vector<64x128xf32> to vector<128xf32>
    %72 = vector.shape_cast %71 : vector<128xf32> to vector<1x128xf32>
    %c4 = arith.constant 4 : index
    %c0_40 = arith.constant 0 : index
    %73 = vector.load %arg7[%c4, %c0_40] : memref<8x128xf32, #tpu.memory_space<vmem>>, vector<1x128xf32>
    tpu.vector_store %arg7[%c4, %c0_40], %72 {strides = array<i32>} : memref<8x128xf32, #tpu.memory_space<vmem>>, vector<1x128xf32>,
    %c5_i32 = arith.constant 5 : i32
    %74 = vector.broadcast %c5_i32 : i32 to vector<64x1xi32>
    %75 = arith.cmpi eq, %5, %74 : vector<64x1xi32>
    %cst_41 = arith.constant -1.000000e+30 : f32
    %76 = vector.shape_cast %75 : vector<64x1xi1> to vector<64x1xi1>
    %77 = vector.broadcast %76 : vector<64x1xi1> to vector<64x128xi1>
    %78 = vector.broadcast %cst_41 : f32 to vector<64x128xf32>
    %79 = arith.select %77, %28, %78 : vector<64x128xi1>, vector<64x128xf32>
    %cst_42 = arith.constant dense<0xFF800000> : vector<128xf32>
    %80 = vector.multi_reduction <maximumf>, %79, %cst_42 [0] : vector<64x128xf32> to vector<128xf32>
    %81 = vector.shape_cast %80 : vector<128xf32> to vector<1x128xf32>
    %c5 = arith.constant 5 : index
    %c0_43 = arith.constant 0 : index
    %82 = vector.load %arg7[%c5, %c0_43] : memref<8x128xf32, #tpu.memory_space<vmem>>, vector<1x128xf32>
    tpu.vector_store %arg7[%c5, %c0_43], %81 {strides = array<i32>} : memref<8x128xf32, #tpu.memory_space<vmem>>, vector<1x128xf32>,
    %c6_i32 = arith.constant 6 : i32
    %83 = vector.broadcast %c6_i32 : i32 to vector<64x1xi32>
    %84 = arith.cmpi eq, %5, %83 : vector<64x1xi32>
    %cst_44 = arith.constant -1.000000e+30 : f32
    %85 = vector.shape_cast %84 : vector<64x1xi1> to vector<64x1xi1>
    %86 = vector.broadcast %85 : vector<64x1xi1> to vector<64x128xi1>
    %87 = vector.broadcast %cst_44 : f32 to vector<64x128xf32>
    %88 = arith.select %86, %28, %87 : vector<64x128xi1>, vector<64x128xf32>
    %cst_45 = arith.constant dense<0xFF800000> : vector<128xf32>
    %89 = vector.multi_reduction <maximumf>, %88, %cst_45 [0] : vector<64x128xf32> to vector<128xf32>
    %90 = vector.shape_cast %89 : vector<128xf32> to vector<1x128xf32>
    %c6 = arith.constant 6 : index
    %c0_46 = arith.constant 0 : index
    %91 = vector.load %arg7[%c6, %c0_46] : memref<8x128xf32, #tpu.memory_space<vmem>>, vector<1x128xf32>
    tpu.vector_store %arg7[%c6, %c0_46], %90 {strides = array<i32>} : memref<8x128xf32, #tpu.memory_space<vmem>>, vector<1x128xf32>,
    %c7_i32 = arith.constant 7 : i32
    %92 = vector.broadcast %c7_i32 : i32 to vector<64x1xi32>
    %93 = arith.cmpi eq, %5, %92 : vector<64x1xi32>
    %cst_47 = arith.constant -1.000000e+30 : f32
    %94 = vector.shape_cast %93 : vector<64x1xi1> to vector<64x1xi1>
    %95 = vector.broadcast %94 : vector<64x1xi1> to vector<64x128xi1>
    %96 = vector.broadcast %cst_47 : f32 to vector<64x128xf32>
    %97 = arith.select %95, %28, %96 : vector<64x128xi1>, vector<64x128xf32>
    %cst_48 = arith.constant dense<0xFF800000> : vector<128xf32>
    %98 = vector.multi_reduction <maximumf>, %97, %cst_48 [0] : vector<64x128xf32> to vector<128xf32>
    %99 = vector.shape_cast %98 : vector<128xf32> to vector<1x128xf32>
    %c7 = arith.constant 7 : index
    %c0_49 = arith.constant 0 : index
    %100 = vector.load %arg7[%c7, %c0_49] : memref<8x128xf32, #tpu.memory_space<vmem>>, vector<1x128xf32>
    tpu.vector_store %arg7[%c7, %c0_49], %99 {strides = array<i32>} : memref<8x128xf32, #tpu.memory_space<vmem>>, vector<1x128xf32>,
    %c0_50 = arith.constant 0 : index
    %c0_51 = arith.constant 0 : index
    %101 = vector.load %arg7[%c0_50, %c0_51] : memref<8x128xf32, #tpu.memory_space<vmem>>, vector<8x128xf32>
    %102 = arith.truncf %101 : vector<8x128xf32> to vector<8x128xbf16>
    %c2_52 = arith.constant 2 : index
    %c0_53 = arith.constant 0 : index
    %c0_54 = arith.constant 0 : index
    %103 = vector.load %arg4[%c2_52, %c0_53, %c0_54] : memref<4x128x128xbf16, #tpu.memory_space<vmem>>, vector<1x128x128xbf16>
    %104 = vector.shape_cast %103 : vector<1x128x128xbf16> to vector<128x128xbf16>
    %cst_55 = arith.constant dense<0.000000e+00> : vector<8x128xf32>
    %105 = tpu.matmul %102, %104, %cst_55 {dimension_numbers = #tpu.dot_dimension_numbers<[1], [0], [0], [1], [0, 0, 1, 1], [], []>} : vector<8x128xbf16>, vector<128x128xbf16>, vector<8x128xf32> -> vector<8x128xf32>
    %c2_56 = arith.constant 2 : index
    %c0_57 = arith.constant 0 : index
    %c0_58 = arith.constant 0 : index
    %106 = vector.load %arg5[%c2_56, %c0_57, %c0_58] : memref<4x1x128xf32, #tpu.memory_space<vmem>>, vector<1x1x128xf32>
    %107 = vector.shape_cast %106 : vector<1x1x128xf32> to vector<1x128xf32>
    %108 = vector.broadcast %107 : vector<1x128xf32> to vector<8x128xf32>
    %109 = arith.addf %105, %108 : vector<8x128xf32>
    %cst_59 = arith.constant 0.000000e+00 : f32
    %110 = vector.broadcast %cst_59 : f32 to vector<8x128xf32>
    %111 = arith.maximumf %109, %110 : vector<8x128xf32>
    %112 = arith.truncf %111 : vector<8x128xf32> to vector<8x128xbf16>
    %c3_60 = arith.constant 3 : index
    %c0_61 = arith.constant 0 : index
    %c0_62 = arith.constant 0 : index
    %113 = vector.load %arg4[%c3_60, %c0_61, %c0_62] : memref<4x128x128xbf16, #tpu.memory_space<vmem>>, vector<1x128x128xbf16>
    %114 = vector.shape_cast %113 : vector<1x128x128xbf16> to vector<128x128xbf16>
    %cst_63 = arith.constant dense<0.000000e+00> : vector<8x128xf32>
    %115 = tpu.matmul %112, %114, %cst_63 {dimension_numbers = #tpu.dot_dimension_numbers<[1], [0], [0], [1], [0, 0, 1, 1], [], []>} : vector<8x128xbf16>, vector<128x128xbf16>, vector<8x128xf32> -> vector<8x128xf32>
    %c3_64 = arith.constant 3 : index
    %c0_65 = arith.constant 0 : index
    %c0_66 = arith.constant 0 : index
    %116 = vector.load %arg5[%c3_64, %c0_65, %c0_66] : memref<4x1x128xf32, #tpu.memory_space<vmem>>, vector<1x1x128xf32>
    %117 = vector.shape_cast %116 : vector<1x1x128xf32> to vector<1x128xf32>
    %118 = vector.broadcast %117 : vector<1x128xf32> to vector<8x128xf32>
    %119 = arith.addf %115, %118 : vector<8x128xf32>
    %c0_67 = arith.constant 0 : index
    %c0_68 = arith.constant 0 : index
    %c0_69 = arith.constant 0 : index
    %120 = vector.load %arg6[%c0_67, %c0_68, %c0_69] : memref<1x8x128xf32, #tpu.memory_space<vmem>>, vector<1x8x128xf32>
    %121 = vector.shape_cast %120 : vector<1x8x128xf32> to vector<8x128xf32>
    %122 = vector.shape_cast %119 : vector<8x128xf32> to vector<1x8x128xf32>
    tpu.vector_store %arg6[%c0_67, %c0_68, %c0_69], %122 {strides = array<i32>} : memref<1x8x128xf32, #tpu.memory_space<vmem>>, vector<1x8x128xf32>,
    return
  }
  func.func @transform_0(%arg0: i32) -> (i32, i32, i32) {
    %c0_i32 = arith.constant 0 : i32
    %c0_i32_0 = arith.constant 0 : i32
    %c0_i32_1 = arith.constant 0 : i32
    return %arg0, %c0_i32, %c0_i32_0 : i32, i32, i32
  }
  func.func @transform_1(%arg0: i32) -> (i32, i32, i32) {
    %c0_i32 = arith.constant 0 : i32
    %c0_i32_0 = arith.constant 0 : i32
    %c0_i32_1 = arith.constant 0 : i32
    return %arg0, %c0_i32, %c0_i32_0 : i32, i32, i32
  }
  func.func @transform_2(%arg0: i32) -> (i32, i32, i32) {
    %c0_i32 = arith.constant 0 : i32
    %c0_i32_0 = arith.constant 0 : i32
    %c0_i32_1 = arith.constant 0 : i32
    return %arg0, %c0_i32, %c0_i32_0 : i32, i32, i32
  }
  func.func @transform_3(%arg0: i32) -> (i32, i32, i32) {
    %c0_i32 = arith.constant 0 : i32
    %c0_i32_0 = arith.constant 0 : i32
    %c0_i32_1 = arith.constant 0 : i32
    %c0_i32_2 = arith.constant 0 : i32
    return %c0_i32, %c0_i32_0, %c0_i32_1 : i32, i32, i32
  }
  func.func @transform_4(%arg0: i32) -> (i32, i32, i32) {
    %c0_i32 = arith.constant 0 : i32
    %c0_i32_0 = arith.constant 0 : i32
    %c0_i32_1 = arith.constant 0 : i32
    %c0_i32_2 = arith.constant 0 : i32
    return %c0_i32, %c0_i32_0, %c0_i32_1 : i32, i32, i32
  }
  func.func @transform_5(%arg0: i32) -> (i32, i32, i32) {
    %c0_i32 = arith.constant 0 : i32
    %c0_i32_0 = arith.constant 0 : i32
    %c0_i32_1 = arith.constant 0 : i32
    return %arg0, %c0_i32, %c0_i32_0 : i32, i32, i32
  }
}

</mosaic_0001>

<llo_original>
// kernel: drugnet_forward.1
$region0: #{drugnet_forward.1}
  #allocation0 [shape = 'u32[]', space=smem, size = 0x4, offset = 0x4, fixed_abs, tag = 'smem constant byte address 0x4 - core index']
  #allocation1 [shape = 'u32[144,128]{1,0:T(1,128)}', space=vmem, size = 0x12000, scoped, tag = 'internal scratch']
  #allocation2 [shape = 'f32[8,128]{1,0:T(8,128)}', space=vmem, size = 0x1000, scoped, tag = 'scratch operand']
  %s0 = inlined_call_operand.vmem [shape: bf16[2,64,64], index: 0, kind: input, shape index: {}]
  %s1 = inlined_call_operand.vmem [shape: bf16[2,64,128], index: 1, kind: input, shape index: {}]
  %s2 = inlined_call_operand.vmem [shape: s32[2,64,1], index: 2, kind: input, shape index: {}]
  %s3 = inlined_call_operand.vmem [shape: bf16[4,128,128], index: 3, kind: input, shape index: {}]
  %s4 = inlined_call_operand.vmem [shape: f32[4,1,128], index: 4, kind: input, shape index: {}]
  %s5 = inlined_call_operand.vmem [shape: f32[2,8,128], index: 5, kind: output, shape index: {}]
  %s6 = sld [smem:[#allocation0]]
  $region53: #{drugnet_forward.1} parent=0
    _
  %s8 = ssub.s32 1, %s6
  %s9 = scalar_select 0, %s8, %s6
  loop: start=0, step=1, limit=4
  $region2: #{drugnet_forward.1} parent=0 // loop_pre_header
    _
  $region3: #{drugnet_forward.1} parent=0 // loop_header
    %s11 = sphi 0, %s15
    %p12 = scmp.ge.s32.totalorder %s11, 4
    %s21 = sphi 0, %s23
    %s24 = sphi 0, %s21
    %s25 = sphi 0, %s24
    %s41 = sphi 0, %s25
    %s47 = sphi 0, %s49
    %s50 = sphi 0, %s47
    %s51 = sphi 0, %s50
    %s67 = sphi 0, %s51
    %s73 = sphi 0, %s75
    %s76 = sphi 0, %s73
    %s77 = sphi 0, %s76
    %s93 = sphi 0, %s77
    %s97 = sphi 0, %s97
    %s99 = sphi 0, %s97
    %s100 = sphi 0, %s99
    %s114 = sphi 0, %s100
    %s118 = sphi 0, %s118
    %s120 = sphi 0, %s118
    %s121 = sphi 0, %s120
    %s135 = sphi 0, %s121
    %s141 = sphi 0, %s143
    %s144 = sphi 0, %s141
    %s145 = sphi 0, %s144
    %s161 = sphi 0, %s145
  $region4: #{drugnet_forward.1} parent=0 // loop_header_branch
    %14 = sbr.rel (%p12) target = $region8
  $region5: #{drugnet_forward.1} parent=0 // loop_body
    %s16 = ssub.s32 %s11, 1
    %s17 = ssub.s32 %s11, 2
    %s18 = sadd.s32 %s11, 1
    %s19 = ssub.s32 %s11, %s18
    %p20 = scmp.eq.s32.totalorder %s19, 0
    %s22 = sadd.s32 %s21, 1
    %s23 = scalar_select %p20, %s21, %s22
    %p26 = pneg %p20
    %p27 = scmp.eq.s32.totalorder %s11, 1
    %p28 = por %p26, %p27
    %p29 = scmp.ne.s32.totalorder %s21, %s24
    %p30 = scmp.eq.s32.totalorder %s11, 0
    %p31 = por %p29, %p30
    %p32 = scmp.ne.s32.totalorder %s21, %s24
    %p33 = scmp.eq.s32.totalorder %s16, 1
    %p34 = por %p32, %p33
    %p35 = scmp.ne.s32.totalorder %s24, %s25
    %p36 = scmp.eq.s32.totalorder %s16, 0
    %p37 = por %p35, %p36
    %p38 = scmp.ne.s32.totalorder %s24, %s25
    %p39 = scmp.eq.s32.totalorder %s17, 1
    %p40 = por %p38, %p39
    %p42 = scmp.ne.s32.totalorder %s25, %s41
    %p43 = scmp.eq.s32.totalorder %s17, 0
    %p44 = por %p42, %p43
    %s45 = ssub.s32 %s11, %s18
    %p46 = scmp.eq.s32.totalorder %s45, 0
    %s48 = sadd.s32 %s47, 1
    %s49 = scalar_select %p46, %s47, %s48
    %p52 = pneg %p46
    %p53 = scmp.eq.s32.totalorder %s11, 1
    %p54 = por %p52, %p53
    %p55 = scmp.ne.s32.totalorder %s47, %s50
    %p56 = scmp.eq.s32.totalorder %s11, 0
    %p57 = por %p55, %p56
    %p58 = scmp.ne.s32.totalorder %s47, %s50
    %p59 = scmp.eq.s32.totalorder %s16, 1
    %p60 = por %p58, %p59
    %p61 = scmp.ne.s32.totalorder %s50, %s51
    %p62 = scmp.eq.s32.totalorder %s16, 0
    %p63 = por %p61, %p62
    %p64 = scmp.ne.s32.totalorder %s50, %s51
    %p65 = scmp.eq.s32.totalorder %s17, 1
    %p66 = por %p64, %p65
    %p68 = scmp.ne.s32.totalorder %s51, %s67
    %p69 = scmp.eq.s32.totalorder %s17, 0
    %p70 = por %p68, %p69
    %s71 = ssub.s32 %s11, %s18
    %p72 = scmp.eq.s32.totalorder %s71, 0
    %s74 = sadd.s32 %s73, 1
    %s75 = scalar_select %p72, %s73, %s74
    %p78 = pneg %p72
    %p79 = scmp.eq.s32.totalorder %s11, 1
    %p80 = por %p78, %p79
    %p81 = scmp.ne.s32.totalorder %s73, %s76
    %p82 = scmp.eq.s32.totalorder %s11, 0
    %p83 = por %p81, %p82
    %p84 = scmp.ne.s32.totalorder %s73, %s76
    %p85 = scmp.eq.s32.totalorder %s16, 1
    %p86 = por %p84, %p85
    %p87 = scmp.ne.s32.totalorder %s76, %s77
    %p88 = scmp.eq.s32.totalorder %s16, 0
    %p89 = por %p87, %p88
    %p90 = scmp.ne.s32.totalorder %s76, %s77
    %p91 = scmp.eq.s32.totalorder %s17, 1
    %p92 = por %p90, %p91
    %p94 = scmp.ne.s32.totalorder %s77, %s93
    %p95 = scmp.eq.s32.totalorder %s17, 0
    %p96 = por %p94, %p95
    %s98 = sadd.s32 %s97, 1
    %p101 = scmp.eq.s32.totalorder %s11, 1
    %p102 = scmp.ne.s32.totalorder %s97, %s99
    %p103 = scmp.eq.s32.totalorder %s11, 0
    %p104 = por %p102, %p103
    %p105 = scmp.ne.s32.totalorder %s97, %s99
    %p106 = scmp.eq.s32.totalorder %s16, 1
    %p107 = por %p105, %p106
    %p108 = scmp.ne.s32.totalorder %s99, %s100
    %p109 = scmp.eq.s32.totalorder %s16, 0
    %p110 = por %p108, %p109
    %p111 = scmp.ne.s32.totalorder %s99, %s100
    %p112 = scmp.eq.s32.totalorder %s17, 1
    %p113 = por %p111, %p112
    %p115 = scmp.ne.s32.totalorder %s100, %s114
    %p116 = scmp.eq.s32.totalorder %s17, 0
    %p117 = por %p115, %p116
    %s119 = sadd.s32 %s118, 1
    %p122 = scmp.eq.s32.totalorder %s11, 1
    %p123 = scmp.ne.s32.totalorder %s118, %s120
    %p124 = scmp.eq.s32.totalorder %s11, 0
    %p125 = por %p123, %p124
    %p126 = scmp.ne.s32.totalorder %s118, %s120
    %p127 = scmp.eq.s32.totalorder %s16, 1
    %p128 = por %p126, %p127
    %p129 = scmp.ne.s32.totalorder %s120, %s121
    %p130 = scmp.eq.s32.totalorder %s16, 0
    %p131 = por %p129, %p130
    %p132 = scmp.ne.s32.totalorder %s120, %s121
    %p133 = scmp.eq.s32.totalorder %s17, 1
    %p134 = por %p132, %p133
    %p136 = scmp.ne.s32.totalorder %s121, %s135
    %p137 = scmp.eq.s32.totalorder %s17, 0
    %p138 = por %p136, %p137
    %s139 = ssub.s32 %s11, %s18
    %p140 = scmp.eq.s32.totalorder %s139, 0
    %s142 = sadd.s32 %s141, 1
    %s143 = scalar_select %p140, %s141, %s142
    %p146 = pneg %p140
    %p147 = scmp.eq.s32.totalorder %s11, 1
    %p148 = por %p146, %p147
    %p149 = scmp.ne.s32.totalorder %s141, %s144
    %p150 = scmp.eq.s32.totalorder %s11, 0
    %p151 = por %p149, %p150
    %p152 = scmp.ne.s32.totalorder %s141, %s144
    %p153 = scmp.eq.s32.totalorder %s16, 1
    %p154 = por %p152, %p153
    %p155 = scmp.ne.s32.totalorder %s144, %s145
    %p156 = scmp.eq.s32.totalorder %s16, 0
    %p157 = por %p155, %p156
    %p158 = scmp.ne.s32.totalorder %s144, %s145
    %p159 = scmp.eq.s32.totalorder %s17, 1
    %p160 = por %p158, %p159
    %p162 = scmp.ne.s32.totalorder %s145, %s161
    %p163 = scmp.eq.s32.totalorder %s17, 0
    %p164 = por %p162, %p163
    %p165 = scmp.le.s32.totalorder 1, %s11
    %p166 = scmp.lt.s32.totalorder %s11, 3
    %p167 = pnand %p165, %p166
    %p168 = pneg %p167
    // Predicated region
    $region9: #{drugnet_forward.1} parent=5 // pred_check
      _
    $region10: #{drugnet_forward.1} parent=5 // pred_check_branch
      %170 = sbr.rel (%p167) target = $region12
    $region11: #{drugnet_forward.1} parent=5 // pred_region
      %s171 = ssub.s32 %s11, 1
      // Predicated region
      $region13: #{drugnet_forward.1} parent=11 // pred_check
        %p172 = pneg %p110
      $region14: #{drugnet_forward.1} parent=11 // pred_check_branch
        %174 = sbr.rel (%p172) target = $region16
      $region15: #{drugnet_forward.1} parent=11 // pred_region
        _
      $region16: #{drugnet_forward.1} parent=11 // pred_fallthru
        _
      // Predicated region
      $region17: #{drugnet_forward.1} parent=11 // pred_check
        %p175 = pneg %p131
      $region18: #{drugnet_forward.1} parent=11 // pred_check_branch
        %177 = sbr.rel (%p175) target = $region20
      $region19: #{drugnet_forward.1} parent=11 // pred_region
        _
      $region20: #{drugnet_forward.1} parent=11 // pred_fallthru
        _
    $region12: #{drugnet_forward.1} parent=5 // pred_fallthru
      _
    %p178 = scmp.lt.s32.totalorder %s11, 2
    // Predicated region
    $region21: #{drugnet_forward.1} parent=5 // pred_check
      %p179 = pneg %p178
    $region22: #{drugnet_forward.1} parent=5 // pred_check_branch
      %181 = sbr.rel (%p179) target = $region24
    $region23: #{drugnet_forward.1} parent=5 // pred_region
      // Predicated region
      $region25: #{drugnet_forward.1} parent=23 // pred_check
        %p182 = pneg %p31
      $region26: #{drugnet_forward.1} parent=23 // pred_check_branch
        %184 = sbr.rel (%p182) target = $region28
      $region27: #{drugnet_forward.1} parent=23 // pred_region
        %p185 = scmp.lt.s32.totalorder %s11, 1
        %s186 = scalar_select %p185, %s11, 1
        %s187 = smul.addr %s186, 8
        %s188 = smul.addr %s187, 4
        %s189 = scalar_lea.vmem %s0, %s188
      $region28: #{drugnet_forward.1} parent=23 // pred_fallthru
        _
      // Predicated region
      $region29: #{drugnet_forward.1} parent=23 // pred_check
        %p190 = pneg %p57
      $region30: #{drugnet_forward.1} parent=23 // pred_check_branch
        %192 = sbr.rel (%p190) target = $region32
      $region31: #{drugnet_forward.1} parent=23 // pred_region
        %p193 = scmp.lt.s32.totalorder %s11, 1
        %s194 = scalar_select %p193, %s11, 1
        %s195 = smul.addr %s194, 8
        %s196 = smul.addr %s195, 4
        %s197 = scalar_lea.vmem %s1, %s196
      $region32: #{drugnet_forward.1} parent=23 // pred_fallthru
        _
      // Predicated region
      $region33: #{drugnet_forward.1} parent=23 // pred_check
        %p198 = pneg %p83
      $region34: #{drugnet_forward.1} parent=23 // pred_check_branch
        %200 = sbr.rel (%p198) target = $region36
      $region35: #{drugnet_forward.1} parent=23 // pred_region
        %p201 = scmp.lt.s32.totalorder %s11, 1
        %s202 = scalar_select %p201, %s11, 1
        %s203 = smul.addr %s202, 8
        %s204 = smul.addr %s203, 8
        %s205 = scalar_lea.vmem %s2, %s204
      $region36: #{drugnet_forward.1} parent=23 // pred_fallthru
        _
    $region24: #{drugnet_forward.1} parent=5 // pred_fallthru
      _
    %p206 = scmp.le.s32.totalorder 1, %s11
    %p207 = scmp.lt.s32.totalorder %s11, 3
    %p208 = pnand %p206, %p207
    %p209 = pneg %p208
    // Predicated region
    $region37: #{drugnet_forward.1} parent=5 // pred_check
      _
    $region38: #{drugnet_forward.1} parent=5 // pred_check_branch
      %211 = sbr.rel (%p208) target = $region40
    $region39: #{drugnet_forward.1} parent=5 // pred_region
      %s212 = ssub.s32 %s11, 1
      %p213 = scmp.lt.s32.totalorder %s16, 1
      %s214 = scalar_select %p213, %s16, 1
      %s215 = smul.addr %s214, 8
      %s216 = smul.addr %s215, 4
      %s217 = scalar_lea.vmem %s0, %s216
      %p218 = pneg %p37
      %p219 = pneg %p34
      %p220 = scmp.lt.s32.totalorder %s16, 1
      %s221 = scalar_select %p220, %s16, 1
      %s222 = smul.addr %s221, 8
      %s223 = smul.addr %s222, 4
      %s224 = scalar_lea.vmem %s1, %s223
      %p225 = pneg %p63
      %p226 = pneg %p60
      %p227 = scmp.lt.s32.totalorder %s16, 1
      %s228 = scalar_select %p227, %s16, 1
      %s229 = smul.addr %s228, 8
      %s230 = smul.addr %s229, 8
      %s231 = scalar_lea.vmem %s2, %s230
      %p232 = pneg %p89
      %p233 = pneg %p86
      %p234 = pneg %p110
      %p235 = pneg %p107
      %p236 = pneg %p131
      %p237 = pneg %p128
      %p238 = pneg %p157
      %p239 = pneg %p154
      %p240 = scmp.lt.s32.totalorder %s16, 1
      %s241 = scalar_select %p240, %s16, 1
      %s242 = smul.addr %s241, 8
      %s243 = scalar_lea.vmem %s5, %s242
      %p244 = scmp.lt.s32.totalorder %s16, 1
      %s245 = scalar_select %p244, %s16, 1
      %s246 = smul.addr %s245, 8
      %s247 = smul.addr %s246, 4
      %s248 = scalar_lea.vmem %s0, %s247
      %p249 = scmp.lt.s32.totalorder %s16, 1
      %s250 = scalar_select %p249, %s16, 1
      %s251 = smul.addr %s250, 8
      %s252 = smul.addr %s251, 4
      %s253 = scalar_lea.vmem %s1, %s252
      %p254 = scmp.lt.s32.totalorder %s16, 1
      %s255 = scalar_select %p254, %s16, 1
      %s256 = smul.addr %s255, 8
      %s257 = smul.addr %s256, 8
      %s258 = scalar_lea.vmem %s2, %s257
      %p259 = scmp.lt.s32.totalorder %s16, 1
      %s260 = scalar_select %p259, %s16, 1
      %s261 = smul.addr %s260, 8
      %s262 = scalar_lea.vmem %s5, %s261
      %v264 = vld [vmem:[%s248] sm:$0xf]
      %v265 = vld [vmem:[%s248 + $0x4] sm:$0xf]
      %v266 = vld [vmem:[%s248 + $0x8] sm:$0xf]
      %v267 = vld [vmem:[%s248 + $0xc] sm:$0xf]
      %v268 = vld [vmem:[%s248 + $0x10] sm:$0xf]
      %v269 = vld [vmem:[%s248 + $0x14] sm:$0xf]
      %v270 = vld [vmem:[%s248 + $0x18] sm:$0xf]
      %v271 = vld [vmem:[%s248 + $0x1c] sm:$0xf]
      %v272 = vld [vmem:[%s253] sm:$0xf]
      %v273 = vld [vmem:[%s253 + $0x4] sm:$0xf]
      %v274 = vld [vmem:[%s253 + $0x8] sm:$0xf]
      %v275 = vld [vmem:[%s253 + $0xc] sm:$0xf]
      %v276 = vld [vmem:[%s253 + $0x10] sm:$0xf]
      %v277 = vld [vmem:[%s253 + $0x14] sm:$0xf]
      %v278 = vld [vmem:[%s253 + $0x18] sm:$0xf]
      %v279 = vld [vmem:[%s253 + $0x1c] sm:$0xf]
      %v280 = vld [vmem:[%s258] sm:$0xff]
      %v281 = vld [vmem:[%s258 + $0x8] sm:$0xff]
      %v282 = vld [vmem:[%s258 + $0x10] sm:$0xff]
      %v283 = vld [vmem:[%s258 + $0x18] sm:$0xff]
      %v284 = vld [vmem:[%s258 + $0x20] sm:$0xff]
      %v285 = vld [vmem:[%s258 + $0x28] sm:$0xff]
      %v286 = vld [vmem:[%s258 + $0x30] sm:$0xff]
      %v287 = vld [vmem:[%s258 + $0x38] sm:$0xff]
      %v296 = vunpack.c.l.b16 %v264
      %v297 = vunpack.c.l.b16 %v265
      %v298 = vunpack.c.l.b16 %v266
      %v299 = vunpack.c.l.b16 %v267
      %v300 = vunpack.c.l.b16 %v268
      %v301 = vunpack.c.l.b16 %v269
      %v302 = vunpack.c.l.b16 %v270
      %v303 = vunpack.c.l.b16 %v271
      %v304 = vpack.c.b16 %v297, %v296
      %v305 = vpack.c.b16 %v299, %v298
      %v306 = vpack.c.b16 %v301, %v300
      %v307 = vpack.c.b16 %v303, %v302
      %v316 = vunpack.c.l.b16 %v272
      %v317 = vunpack.c.l.b16 %v273
      %v318 = vunpack.c.l.b16 %v274
      %v319 = vunpack.c.l.b16 %v275
      %v320 = vunpack.c.l.b16 %v276
      %v321 = vunpack.c.l.b16 %v277
      %v322 = vunpack.c.l.b16 %v278
      %v323 = vunpack.c.l.b16 %v279
      %v324 = vpack.c.b16 %v317, %v316
      %v325 = vpack.c.b16 %v319, %v318
      %v326 = vpack.c.b16 %v321, %v320
      %v327 = vpack.c.b16 %v323, %v322
      %vm332 = vcmask 523264
      %v334 = vsel %vm332, %v304, 0
      %v337 = vsel %vm332, %v305, 0
      %v340 = vsel %vm332, %v306, 0
      %v343 = vsel %vm332, %v307, 0
      %345 = vmatprep.subr.bf16.mxu0 0
      %346 = vmatpush1.bf16.msra.mxu0 0
      %347 = vmatprep.subr.bf16.mxu0 0
      %348 = vmatpush1.bf16.msra.mxu0 0
      %349 = vmatprep.subr.bf16.mxu0 0
      %350 = vmatpush1.bf16.msra.mxu0 0
      %351 = vmatprep.subr.bf16.mxu0 0
      %352 = vmatpush1.bf16.msra.mxu0 0
      %353 = vmatprep.subr.bf16.mxu0 0
      %354 = vmatpush1.bf16.msra.mxu0 %v327
      %355 = vmatprep.subr.bf16.mxu0 0
      %356 = vmatpush1.bf16.msra.mxu0 %v326
      %357 = vmatprep.subr.bf16.mxu0 0
      %358 = vmatpush1.bf16.msra.mxu0 %v325
      %359 = vmatprep.subr.bf16.mxu0 0
      %360 = vmatpush1.bf16.msra.mxu0 %v324
      %361 = vmatprep.subr.bf16.mxu0 0
      %362 = vmatpush2.bf16.msra.mxu0 0
      %363 = vmatprep.subr.bf16.mxu0 0
      %364 = vmatpush2.bf16.msra.mxu0 0
      %365 = vmatprep.subr.bf16.mxu0 0
      %366 = vmatpush2.bf16.msra.mxu0 0
      %367 = vmatprep.subr.bf16.mxu0 0
      %368 = vmatpush2.bf16.msra.mxu0 0
      %369 = vmatprep.subr.bf16.mxu0 0
      %370 = vmatpush2.bf16.msra.mxu0 0
      %371 = vmatprep.subr.bf16.mxu0 0
      %372 = vmatpush2.bf16.msra.mxu0 0
      %373 = vmatprep.subr.bf16.mxu0 0
      %374 = vmatpush2.bf16.msra.mxu0 0
      %375 = vmatprep.subr.bf16.mxu0 0
      %376 = vmatpush2.bf16.msra.mxu0 0
      %377 = vmatprep.mubr.bf16.mxu0 0
      %378 = vmatmul.mubr.bf16.gmra.mxu0 %v334
      %v379 = vpop.f32.mrf.mxu0
      %v380 = vadd.f32 0.0, %v379
      %v381 = vpop.f32.mrf.mxu0
      %v382 = vpop.f32.mrf.mxu0
      %v383 = vadd.f32 0.0, %v382
      %v384 = vpop.f32.mrf.mxu0
      %385 = vmatprep.mubr.bf16.mxu0 0
      %386 = vmatmul.mubr.bf16.gmra.mxu0 %v337
      %v387 = vpop.f32.mrf.mxu0
      %v388 = vadd.f32 0.0, %v387
      %v389 = vpop.f32.mrf.mxu0
      %v390 = vpop.f32.mrf.mxu0
      %v391 = vadd.f32 0.0, %v390
      %v392 = vpop.f32.mrf.mxu0
      %393 = vmatprep.mubr.bf16.mxu0 0
      %394 = vmatmul.mubr.bf16.gmra.mxu0 %v340
      %v395 = vpop.f32.mrf.mxu0
      %v396 = vadd.f32 0.0, %v395
      %v397 = vpop.f32.mrf.mxu0
      %v398 = vpop.f32.mrf.mxu0
      %v399 = vadd.f32 0.0, %v398
      %v400 = vpop.f32.mrf.mxu0
      %401 = vmatprep.mubr.bf16.mxu0 0
      %402 = vmatmul.mubr.bf16.gmra.mxu0 %v343
      %v403 = vpop.f32.mrf.mxu0
      %v404 = vadd.f32 0.0, %v403
      %v405 = vpop.f32.mrf.mxu0
      %v406 = vpop.f32.mrf.mxu0
      %v407 = vadd.f32 0.0, %v406
      %v408 = vpop.f32.mrf.mxu0
      %409 = vdwg.mxu0
      %v410 = vpack.c.bf16 %v383, %v380
      %v411 = vpack.c.bf16 %v391, %v388
      %v412 = vpack.c.bf16 %v399, %v396
      %v413 = vpack.c.bf16 %v407, %v404
      %v414 = vld [vmem:[%s3] sm:$0xf]
      %v415 = vld [vmem:[%s3 + $0x4] sm:$0xf]
      %v416 = vld [vmem:[%s3 + $0x8] sm:$0xf]
      %v417 = vld [vmem:[%s3 + $0xc] sm:$0xf]
      %v418 = vld [vmem:[%s3 + $0x10] sm:$0xf]
      %v419 = vld [vmem:[%s3 + $0x14] sm:$0xf]
      %v420 = vld [vmem:[%s3 + $0x18] sm:$0xf]
      %v421 = vld [vmem:[%s3 + $0x1c] sm:$0xf]
      %v422 = vld [vmem:[%s3 + $0x20] sm:$0xf]
      %v423 = vld [vmem:[%s3 + $0x24] sm:$0xf]
      %v424 = vld [vmem:[%s3 + $0x28] sm:$0xf]
      %v425 = vld [vmem:[%s3 + $0x2c] sm:$0xf]
      %v426 = vld [vmem:[%s3 + $0x30] sm:$0xf]
      %v427 = vld [vmem:[%s3 + $0x34] sm:$0xf]
      %v428 = vld [vmem:[%s3 + $0x38] sm:$0xf]
      %v429 = vld [vmem:[%s3 + $0x3c] sm:$0xf]
      %v430 = vld [vmem:[%s4] sm:$0x1]
      %v432 = vlaneseq
      %v433 = vshrl.u32 %v432, 7
      %v434 = vsub.s32 0, %v433
      %v435 = vrot.slane %v430, %v434
      %v453 = vunpack.c.l.b16 %v414
      %v454 = vunpack.c.l.b16 %v415
      %v455 = vunpack.c.l.b16 %v416
      %v456 = vunpack.c.l.b16 %v417
      %v457 = vunpack.c.l.b16 %v418
      %v458 = vunpack.c.l.b16 %v419
      %v459 = vunpack.c.l.b16 %v420
      %v460 = vunpack.c.l.b16 %v421
      %v461 = vunpack.c.l.b16 %v422
      %v462 = vunpack.c.l.b16 %v423
      %v463 = vunpack.c.l.b16 %v424
      %v464 = vunpack.c.l.b16 %v425
      %v465 = vunpack.c.l.b16 %v426
      %v466 = vunpack.c.l.b16 %v427
      %v467 = vunpack.c.l.b16 %v428
      %v468 = vunpack.c.l.b16 %v429
      %v469 = vpack.c.b16 %v454, %v453
      %v470 = vpack.c.b16 %v456, %v455
      %v471 = vpack.c.b16 %v458, %v457
      %v472 = vpack.c.b16 %v460, %v459
      %v473 = vpack.c.b16 %v462, %v461
      %v474 = vpack.c.b16 %v464, %v463
      %v475 = vpack.c.b16 %v466, %v465
      %v476 = vpack.c.b16 %v468, %v467
      %485 = vmatprep.subr.bf16.mxu0 0
      %486 = vmatpush1.bf16.msra.mxu0 %v476
      %487 = vmatprep.subr.bf16.mxu0 0
      %488 = vmatpush1.bf16.msra.mxu0 %v475
      %489 = vmatprep.subr.bf16.mxu0 0
      %490 = vmatpush1.bf16.msra.mxu0 %v474
      %491 = vmatprep.subr.bf16.mxu0 0
      %492 = vmatpush1.bf16.msra.mxu0 %v473
      %493 = vmatprep.subr.bf16.mxu0 0
      %494 = vmatpush1.bf16.msra.mxu0 %v472
      %495 = vmatprep.subr.bf16.mxu0 0
      %496 = vmatpush1.bf16.msra.mxu0 %v471
      %497 = vmatprep.subr.bf16.mxu0 0
      %498 = vmatpush1.bf16.msra.mxu0 %v470
      %499 = vmatprep.subr.bf16.mxu0 0
      %500 = vmatpush1.bf16.msra.mxu0 %v469
      %501 = vmatprep.subr.bf16.mxu0 0
      %502 = vmatpush2.bf16.msra.mxu0 0
      %503 = vmatprep.subr.bf16.mxu0 0
      %504 = vmatpush2.bf16.msra.mxu0 0
      %505 = vmatprep.subr.bf16.mxu0 0
      %506 = vmatpush2.bf16.msra.mxu0 0
      %507 = vmatprep.subr.bf16.mxu0 0
      %508 = vmatpush2.bf16.msra.mxu0 0
      %509 = vmatprep.subr.bf16.mxu0 0
      %510 = vmatpush2.bf16.msra.mxu0 0
      %511 = vmatprep.subr.bf16.mxu0 0
      %512 = vmatpush2.bf16.msra.mxu0 0
      %513 = vmatprep.subr.bf16.mxu0 0
      %514 = vmatpush2.bf16.msra.mxu0 0
      %515 = vmatprep.subr.bf16.mxu0 0
      %516 = vmatpush2.bf16.msra.mxu0 0
      %517 = vmatprep.mubr.bf16.mxu0 0
      %518 = vmatmul.mubr.bf16.gmra.mxu0 %v410
      %v519 = vpop.f32.mrf.mxu0
      %v520 = vadd.f32 %v435, %v519
      %v521 = vpop.f32.mrf.mxu0
      %v522 = vpop.f32.mrf.mxu0
      %v523 = vadd.f32 %v435, %v522
      %v524 = vpop.f32.mrf.mxu0
      %525 = vmatprep.mubr.bf16.mxu0 0
      %526 = vmatmul.mubr.bf16.gmra.mxu0 %v411
      %v527 = vpop.f32.mrf.mxu0
      %v528 = vadd.f32 %v435, %v527
      %v529 = vpop.f32.mrf.mxu0
      %v530 = vpop.f32.mrf.mxu0
      %v531 = vadd.f32 %v435, %v530
      %v532 = vpop.f32.mrf.mxu0
      %533 = vmatprep.mubr.bf16.mxu0 0
      %534 = vmatmul.mubr.bf16.gmra.mxu0 %v412
      %v535 = vpop.f32.mrf.mxu0
      %v536 = vadd.f32 %v435, %v535
      %v537 = vpop.f32.mrf.mxu0
      %v538 = vpop.f32.mrf.mxu0
      %v539 = vadd.f32 %v435, %v538
      %v540 = vpop.f32.mrf.mxu0
      %541 = vmatprep.mubr.bf16.mxu0 0
      %542 = vmatmul.mubr.bf16.gmra.mxu0 %v413
      %v543 = vpop.f32.mrf.mxu0
      %v544 = vadd.f32 %v435, %v543
      %v545 = vpop.f32.mrf.mxu0
      %v546 = vpop.f32.mrf.mxu0
      %v547 = vadd.f32 %v435, %v546
      %v548 = vpop.f32.mrf.mxu0
      %549 = vdwg.mxu0
      %v550 = vmax.f32 %v520, 0.0
      %v551 = vmax.f32 %v523, 0.0
      %v552 = vmax.f32 %v528, 0.0
      %v553 = vmax.f32 %v531, 0.0
      %v554 = vmax.f32 %v536, 0.0
      %v555 = vmax.f32 %v539, 0.0
      %v556 = vmax.f32 %v544, 0.0
      %v557 = vmax.f32 %v547, 0.0
      %v558 = vpack.c.bf16 %v551, %v550
      %v559 = vpack.c.bf16 %v553, %v552
      %v560 = vpack.c.bf16 %v555, %v554
      %v561 = vpack.c.bf16 %v557, %v556
      %562 = vmatprep.subr.bf16.mxu0 0
      %563 = vmatpush1.bf16.msra.mxu0 0
      %564 = vmatprep.subr.bf16.mxu0 0
      %565 = vmatpush1.bf16.msra.mxu0 0
      %566 = vmatprep.subr.bf16.mxu0 0
      %567 = vmatpush1.bf16.msra.mxu0 0
      %568 = vmatprep.subr.bf16.mxu0 0
      %569 = vmatpush1.bf16.msra.mxu0 0
      %570 = vmatprep.subr.bf16.mxu0 0
      %571 = vmatpush1.bf16.msra.mxu0 %v561
      %572 = vmatprep.subr.bf16.mxu0 0
      %573 = vmatpush1.bf16.msra.mxu0 %v560
      %574 = vmatprep.subr.bf16.mxu0 0
      %575 = vmatpush1.bf16.msra.mxu0 %v559
      %576 = vmatprep.subr.bf16.mxu0 0
      %577 = vmatpush1.bf16.msra.mxu0 %v558
      %578 = vmatprep.subr.bf16.mxu0 0
      %579 = vmatpush2.bf16.msra.mxu0 0
      %580 = vmatprep.subr.bf16.mxu0 0
      %581 = vmatpush2.bf16.msra.mxu0 0
      %582 = vmatprep.subr.bf16.mxu0 0
      %583 = vmatpush2.bf16.msra.mxu0 0
      %584 = vmatprep.subr.bf16.mxu0 0
      %585 = vmatpush2.bf16.msra.mxu0 0
      %586 = vmatprep.subr.bf16.mxu0 0
      %587 = vmatpush2.bf16.msra.mxu0 0
      %588 = vmatprep.subr.bf16.mxu0 0
      %589 = vmatpush2.bf16.msra.mxu0 0
      %590 = vmatprep.subr.bf16.mxu0 0
      %591 = vmatpush2.bf16.msra.mxu0 0
      %592 = vmatprep.subr.bf16.mxu0 0
      %593 = vmatpush2.bf16.msra.mxu0 0
      %594 = vmatprep.mubr.bf16.mxu0 0
      %595 = vmatmul.mubr.bf16.gmra.mxu0 %v334
      %v596 = vpop.f32.mrf.mxu0
      %v597 = vadd.f32 0.0, %v596
      %v598 = vpop.f32.mrf.mxu0
      %v599 = vpop.f32.mrf.mxu0
      %v600 = vadd.f32 0.0, %v599
      %v601 = vpop.f32.mrf.mxu0
      %602 = vmatprep.mubr.bf16.mxu0 0
      %603 = vmatmul.mubr.bf16.gmra.mxu0 %v337
      %v604 = vpop.f32.mrf.mxu0
      %v605 = vadd.f32 0.0, %v604
      %v606 = vpop.f32.mrf.mxu0
      %v607 = vpop.f32.mrf.mxu0
      %v608 = vadd.f32 0.0, %v607
      %v609 = vpop.f32.mrf.mxu0
      %610 = vmatprep.mubr.bf16.mxu0 0
      %611 = vmatmul.mubr.bf16.gmra.mxu0 %v340
      %v612 = vpop.f32.mrf.mxu0
      %v613 = vadd.f32 0.0, %v612
      %v614 = vpop.f32.mrf.mxu0
      %v615 = vpop.f32.mrf.mxu0
      %v616 = vadd.f32 0.0, %v615
      %v617 = vpop.f32.mrf.mxu0
      %618 = vmatprep.mubr.bf16.mxu0 0
      %619 = vmatmul.mubr.bf16.gmra.mxu0 %v343
      %v620 = vpop.f32.mrf.mxu0
      %v621 = vadd.f32 0.0, %v620
      %v622 = vpop.f32.mrf.mxu0
      %v623 = vpop.f32.mrf.mxu0
      %v624 = vadd.f32 0.0, %v623
      %v625 = vpop.f32.mrf.mxu0
      %626 = vdwg.mxu0
      %v627 = vpack.c.bf16 %v600, %v597
      %v628 = vpack.c.bf16 %v608, %v605
      %v629 = vpack.c.bf16 %v616, %v613
      %v630 = vpack.c.bf16 %v624, %v621
      %s631 = scalar_lea.vmem %s3, 64
      %v632 = vld [vmem:[%s631] sm:$0xf]
      %v633 = vld [vmem:[%s631 + $0x4] sm:$0xf]
      %v634 = vld [vmem:[%s631 + $0x8] sm:$0xf]
      %v635 = vld [vmem:[%s631 + $0xc] sm:$0xf]
      %v636 = vld [vmem:[%s631 + $0x10] sm:$0xf]
      %v637 = vld [vmem:[%s631 + $0x14] sm:$0xf]
      %v638 = vld [vmem:[%s631 + $0x18] sm:$0xf]
      %v639 = vld [vmem:[%s631 + $0x1c] sm:$0xf]
      %v640 = vld [vmem:[%s631 + $0x20] sm:$0xf]
      %v641 = vld [vmem:[%s631 + $0x24] sm:$0xf]
      %v642 = vld [vmem:[%s631 + $0x28] sm:$0xf]
      %v643 = vld [vmem:[%s631 + $0x2c] sm:$0xf]
      %v644 = vld [vmem:[%s631 + $0x30] sm:$0xf]
      %v645 = vld [vmem:[%s631 + $0x34] sm:$0xf]
      %v646 = vld [vmem:[%s631 + $0x38] sm:$0xf]
      %v647 = vld [vmem:[%s631 + $0x3c] sm:$0xf]
      %s648 = scalar_lea.vmem %s4, 1
      %v649 = vld [vmem:[%s648] sm:$0x1]
      %v651 = vlaneseq
      %v652 = vshrl.u32 %v651, 7
      %v653 = vsub.s32 0, %v652
      %v654 = vrot.slane %v649, %v653
      %v672 = vunpack.c.l.b16 %v632
      %v673 = vunpack.c.l.b16 %v633
      %v674 = vunpack.c.l.b16 %v634
      %v675 = vunpack.c.l.b16 %v635
      %v676 = vunpack.c.l.b16 %v636
      %v677 = vunpack.c.l.b16 %v637
      %v678 = vunpack.c.l.b16 %v638
      %v679 = vunpack.c.l.b16 %v639
      %v680 = vunpack.c.l.b16 %v640
      %v681 = vunpack.c.l.b16 %v641
      %v682 = vunpack.c.l.b16 %v642
      %v683 = vunpack.c.l.b16 %v643
      %v684 = vunpack.c.l.b16 %v644
      %v685 = vunpack.c.l.b16 %v645
      %v686 = vunpack.c.l.b16 %v646
      %v687 = vunpack.c.l.b16 %v647
      %v688 = vpack.c.b16 %v673, %v672
      %v689 = vpack.c.b16 %v675, %v674
      %v690 = vpack.c.b16 %v677, %v676
      %v691 = vpack.c.b16 %v679, %v678
      %v692 = vpack.c.b16 %v681, %v680
      %v693 = vpack.c.b16 %v683, %v682
      %v694 = vpack.c.b16 %v685, %v684
      %v695 = vpack.c.b16 %v687, %v686
      %704 = vmatprep.subr.bf16.mxu0 0
      %705 = vmatpush1.bf16.msra.mxu0 %v695
      %706 = vmatprep.subr.bf16.mxu0 0
      %707 = vmatpush1.bf16.msra.mxu0 %v694
      %708 = vmatprep.subr.bf16.mxu0 0
      %709 = vmatpush1.bf16.msra.mxu0 %v693
      %710 = vmatprep.subr.bf16.mxu0 0
      %711 = vmatpush1.bf16.msra.mxu0 %v692
      %712 = vmatprep.subr.bf16.mxu0 0
      %713 = vmatpush1.bf16.msra.mxu0 %v691
      %714 = vmatprep.subr.bf16.mxu0 0
      %715 = vmatpush1.bf16.msra.mxu0 %v690
      %716 = vmatprep.subr.bf16.mxu0 0
      %717 = vmatpush1.bf16.msra.mxu0 %v689
      %718 = vmatprep.subr.bf16.mxu0 0
      %719 = vmatpush1.bf16.msra.mxu0 %v688
      %720 = vmatprep.subr.bf16.mxu0 0
      %721 = vmatpush2.bf16.msra.mxu0 0
      %722 = vmatprep.subr.bf16.mxu0 0
      %723 = vmatpush2.bf16.msra.mxu0 0
      %724 = vmatprep.subr.bf16.mxu0 0
      %725 = vmatpush2.bf16.msra.mxu0 0
      %726 = vmatprep.subr.bf16.mxu0 0
      %727 = vmatpush2.bf16.msra.mxu0 0
      %728 = vmatprep.subr.bf16.mxu0 0
      %729 = vmatpush2.bf16.msra.mxu0 0
      %730 = vmatprep.subr.bf16.mxu0 0
      %731 = vmatpush2.bf16.msra.mxu0 0
      %732 = vmatprep.subr.bf16.mxu0 0
      %733 = vmatpush2.bf16.msra.mxu0 0
      %734 = vmatprep.subr.bf16.mxu0 0
      %735 = vmatpush2.bf16.msra.mxu0 0
      %736 = vmatprep.mubr.bf16.mxu0 0
      %737 = vmatmul.mubr.bf16.gmra.mxu0 %v627
      %v738 = vpop.f32.mrf.mxu0
      %v739 = vadd.f32 %v654, %v738
      %v740 = vpop.f32.mrf.mxu0
      %v741 = vpop.f32.mrf.mxu0
      %v742 = vadd.f32 %v654, %v741
      %v743 = vpop.f32.mrf.mxu0
      %744 = vmatprep.mubr.bf16.mxu0 0
      %745 = vmatmul.mubr.bf16.gmra.mxu0 %v628
      %v746 = vpop.f32.mrf.mxu0
      %v747 = vadd.f32 %v654, %v746
      %v748 = vpop.f32.mrf.mxu0
      %v749 = vpop.f32.mrf.mxu0
      %v750 = vadd.f32 %v654, %v749
      %v751 = vpop.f32.mrf.mxu0
      %752 = vmatprep.mubr.bf16.mxu0 0
      %753 = vmatmul.mubr.bf16.gmra.mxu0 %v629
      %v754 = vpop.f32.mrf.mxu0
      %v755 = vadd.f32 %v654, %v754
      %v756 = vpop.f32.mrf.mxu0
      %v757 = vpop.f32.mrf.mxu0
      %v758 = vadd.f32 %v654, %v757
      %v759 = vpop.f32.mrf.mxu0
      %760 = vmatprep.mubr.bf16.mxu0 0
      %761 = vmatmul.mubr.bf16.gmra.mxu0 %v630
      %v762 = vpop.f32.mrf.mxu0
      %v763 = vadd.f32 %v654, %v762
      %v764 = vpop.f32.mrf.mxu0
      %v765 = vpop.f32.mrf.mxu0
      %v766 = vadd.f32 %v654, %v765
      %v767 = vpop.f32.mrf.mxu0
      %768 = vdwg.mxu0
      %v769 = vmax.f32 %v739, 0.0
      %v770 = vmax.f32 %v742, 0.0
      %v771 = vmax.f32 %v747, 0.0
      %v772 = vmax.f32 %v750, 0.0
      %v773 = vmax.f32 %v755, 0.0
      %v774 = vmax.f32 %v758, 0.0
      %v775 = vmax.f32 %v763, 0.0
      %v776 = vmax.f32 %v766, 0.0
      %vm777 = vcmp.eq.s32.totalorder %v280, 0
      %vm778 = vcmp.eq.s32.totalorder %v281, 0
      %vm779 = vcmp.eq.s32.totalorder %v282, 0
      %vm780 = vcmp.eq.s32.totalorder %v283, 0
      %vm781 = vcmp.eq.s32.totalorder %v284, 0
      %vm782 = vcmp.eq.s32.totalorder %v285, 0
      %vm783 = vcmp.eq.s32.totalorder %v286, 0
      %vm784 = vcmp.eq.s32.totalorder %v287, 0
      %v785 = vsel %vm777, 1, 0
      %v786 = vsel %vm778, 1, 0
      %v787 = vsel %vm779, 1, 0
      %v788 = vsel %vm780, 1, 0
      %v789 = vsel %vm781, 1, 0
      %v790 = vsel %vm782, 1, 0
      %v791 = vsel %vm783, 1, 0
      %v792 = vsel %vm784, 1, 0
      %793 = vset.pattern.permute.xlu0 0
      %794 = vperm.xlu0 %793, %v785
      %v795 = vpop.permute.xlu0 %794
      %796 = vset.pattern.permute.xlu0 0
      %797 = vperm.xlu0 %796, %v786
      %v798 = vpop.permute.xlu0 %797
      %799 = vset.pattern.permute.xlu0 0
      %800 = vperm.xlu0 %799, %v787
      %v801 = vpop.permute.xlu0 %800
      %802 = vset.pattern.permute.xlu0 0
      %803 = vperm.xlu0 %802, %v788
      %v804 = vpop.permute.xlu0 %803
      %805 = vset.pattern.permute.xlu0 0
      %806 = vperm.xlu0 %805, %v789
      %v807 = vpop.permute.xlu0 %806
      %808 = vset.pattern.permute.xlu0 0
      %809 = vperm.xlu0 %808, %v790
      %v810 = vpop.permute.xlu0 %809
      %811 = vset.pattern.permute.xlu0 0
      %812 = vperm.xlu0 %811, %v791
      %v813 = vpop.permute.xlu0 %812
      %814 = vset.pattern.permute.xlu0 0
      %815 = vperm.xlu0 %814, %v792
      %v816 = vpop.permute.xlu0 %815
      %vm817 = vcmp.eq.s32.totalorder %v795, 1
      %vm818 = vcmp.eq.s32.totalorder %v798, 1
      %vm819 = vcmp.eq.s32.totalorder %v801, 1
      %vm820 = vcmp.eq.s32.totalorder %v804, 1
      %vm821 = vcmp.eq.s32.totalorder %v807, 1
      %vm822 = vcmp.eq.s32.totalorder %v810, 1
      %vm823 = vcmp.eq.s32.totalorder %v813, 1
      %vm824 = vcmp.eq.s32.totalorder %v816, 1
      %v825 = vsel %vm817, %v769, -1e+30
      %v826 = vsel %vm818, %v770, -1e+30
      %v827 = vsel %vm819, %v771, -1e+30
      %v828 = vsel %vm820, %v772, -1e+30
      %v829 = vsel %vm821, %v773, -1e+30
      %v830 = vsel %vm822, %v774, -1e+30
      %v831 = vsel %vm823, %v775, -1e+30
      %v832 = vsel %vm824, %v776, -1e+30
      %v833 = vmax.f32 %v825, %v829
      %v834 = vmax.f32 %v826, %v830
      %v835 = vmax.f32 %v827, %v831
      %v836 = vmax.f32 %v828, %v832
      %v837 = vmax.f32 %v833, %v834
      %v838 = vmax.f32 %v835, %v836
      %v839 = vmax.f32 %v837, %v838
      %v840 = vrot.slane %v839, 4
      %v841 = vmax.f32 %v839, %v840
      %v842 = vrot.slane %v841, 2
      %v843 = vmax.f32 %v841, %v842
      %v844 = vrot.slane %v843, 1
      %v845 = vmax.f32 %v843, %v844
      %846 = vst [vmem:[#allocation2] sm:$0x1] %v845
      %vm847 = vcmp.eq.s32.totalorder %v280, 1
      %vm848 = vcmp.eq.s32.totalorder %v281, 1
      %vm849 = vcmp.eq.s32.totalorder %v282, 1
      %vm850 = vcmp.eq.s32.totalorder %v283, 1
      %vm851 = vcmp.eq.s32.totalorder %v284, 1
      %vm852 = vcmp.eq.s32.totalorder %v285, 1
      %vm853 = vcmp.eq.s32.totalorder %v286, 1
      %vm854 = vcmp.eq.s32.totalorder %v287, 1
      %v855 = vsel %vm847, 1, 0
      %v856 = vsel %vm848, 1, 0
      %v857 = vsel %vm849, 1, 0
      %v858 = vsel %vm850, 1, 0
      %v859 = vsel %vm851, 1, 0
      %v860 = vsel %vm852, 1, 0
      %v861 = vsel %vm853, 1, 0
      %v862 = vsel %vm854, 1, 0
      %863 = vset.pattern.permute.xlu0 0
      %864 = vperm.xlu0 %863, %v855
      %v865 = vpop.permute.xlu0 %864
      %866 = vset.pattern.permute.xlu0 0
      %867 = vperm.xlu0 %866, %v856
      %v868 = vpop.permute.xlu0 %867
      %869 = vset.pattern.permute.xlu0 0
      %870 = vperm.xlu0 %869, %v857
      %v871 = vpop.permute.xlu0 %870
      %872 = vset.pattern.permute.xlu0 0
      %873 = vperm.xlu0 %872, %v858
      %v874 = vpop.permute.xlu0 %873
      %875 = vset.pattern.permute.xlu0 0
      %876 = vperm.xlu0 %875, %v859
      %v877 = vpop.permute.xlu0 %876
      %878 = vset.pattern.permute.xlu0 0
      %879 = vperm.xlu0 %878, %v860
      %v880 = vpop.permute.xlu0 %879
      %881 = vset.pattern.permute.xlu0 0
      %882 = vperm.xlu0 %881, %v861
      %v883 = vpop.permute.xlu0 %882
      %884 = vset.pattern.permute.xlu0 0
      %885 = vperm.xlu0 %884, %v862
      %v886 = vpop.permute.xlu0 %885
      %vm887 = vcmp.eq.s32.totalorder %v865, 1
      %vm888 = vcmp.eq.s32.totalorder %v868, 1
      %vm889 = vcmp.eq.s32.totalorder %v871, 1
      %vm890 = vcmp.eq.s32.totalorder %v874, 1
      %vm891 = vcmp.eq.s32.totalorder %v877, 1
      %vm892 = vcmp.eq.s32.totalorder %v880, 1
      %vm893 = vcmp.eq.s32.totalorder %v883, 1
      %vm894 = vcmp.eq.s32.totalorder %v886, 1
      %v895 = vsel %vm887, %v769, -1e+30
      %v896 = vsel %vm888, %v770, -1e+30
      %v897 = vsel %vm889, %v771, -1e+30
      %v898 = vsel %vm890, %v772, -1e+30
      %v899 = vsel %vm891, %v773, -1e+30
      %v900 = vsel %vm892, %v774, -1e+30
      %v901 = vsel %vm893, %v775, -1e+30
      %v902 = vsel %vm894, %v776, -1e+30
      %v903 = vmax.f32 %v895, %v899
      %v904 = vmax.f32 %v896, %v900
      %v905 = vmax.f32 %v897, %v901
      %v906 = vmax.f32 %v898, %v902
      %v907 = vmax.f32 %v903, %v904
      %v908 = vmax.f32 %v905, %v906
      %v909 = vmax.f32 %v907, %v908
      %v910 = vrot.slane %v909, 4
      %v911 = vmax.f32 %v909, %v910
      %v912 = vrot.slane %v911, 2
      %v913 = vmax.f32 %v911, %v912
      %v914 = vrot.slane %v913, 1
      %v915 = vmax.f32 %v913, %v914
      %916 = vst [vmem:[#allocation2 + $0x1] sm:$0x1] %v915
      %vm917 = vcmp.eq.s32.totalorder %v280, 2
      %vm918 = vcmp.eq.s32.totalorder %v281, 2
      %vm919 = vcmp.eq.s32.totalorder %v282, 2
      %vm920 = vcmp.eq.s32.totalorder %v283, 2
      %vm921 = vcmp.eq.s32.totalorder %v284, 2
      %vm922 = vcmp.eq.s32.totalorder %v285, 2
      %vm923 = vcmp.eq.s32.totalorder %v286, 2
      %vm924 = vcmp.eq.s32.totalorder %v287, 2
      %v925 = vsel %vm917, 1, 0
      %v926 = vsel %vm918, 1, 0
      %v927 = vsel %vm919, 1, 0
      %v928 = vsel %vm920, 1, 0
      %v929 = vsel %vm921, 1, 0
      %v930 = vsel %vm922, 1, 0
      %v931 = vsel %vm923, 1, 0
      %v932 = vsel %vm924, 1, 0
      %933 = vset.pattern.permute.xlu0 0
      %934 = vperm.xlu0 %933, %v925
      %v935 = vpop.permute.xlu0 %934
      %936 = vset.pattern.permute.xlu0 0
      %937 = vperm.xlu0 %936, %v926
      %v938 = vpop.permute.xlu0 %937
      %939 = vset.pattern.permute.xlu0 0
      %940 = vperm.xlu0 %939, %v927
      %v941 = vpop.permute.xlu0 %940
      %942 = vset.pattern.permute.xlu0 0
      %943 = vperm.xlu0 %942, %v928
      %v944 = vpop.permute.xlu0 %943
      %945 = vset.pattern.permute.xlu0 0
      %946 = vperm.xlu0 %945, %v929
      %v947 = vpop.permute.xlu0 %946
      %948 = vset.pattern.permute.xlu0 0
      %949 = vperm.xlu0 %948, %v930
      %v950 = vpop.permute.xlu0 %949
      %951 = vset.pattern.permute.xlu0 0
      %952 = vperm.xlu0 %951, %v931
      %v953 = vpop.permute.xlu0 %952
      %954 = vset.pattern.permute.xlu0 0
      %955 = vperm.xlu0 %954, %v932
      %v956 = vpop.permute.xlu0 %955
      %vm957 = vcmp.eq.s32.totalorder %v935, 1
      %vm958 = vcmp.eq.s32.totalorder %v938, 1
      %vm959 = vcmp.eq.s32.totalorder %v941, 1
      %vm960 = vcmp.eq.s32.totalorder %v944, 1
      %vm961 = vcmp.eq.s32.totalorder %v947, 1
      %vm962 = vcmp.eq.s32.totalorder %v950, 1
      %vm963 = vcmp.eq.s32.totalorder %v953, 1
      %vm964 = vcmp.eq.s32.totalorder %v956, 1
      %v965 = vsel %vm957, %v769, -1e+30
      %v966 = vsel %vm958, %v770, -1e+30
      %v967 = vsel %vm959, %v771, -1e+30
      %v968 = vsel %vm960, %v772, -1e+30
      %v969 = vsel %vm961, %v773, -1e+30
      %v970 = vsel %vm962, %v774, -1e+30
      %v971 = vsel %vm963, %v775, -1e+30
      %v972 = vsel %vm964, %v776, -1e+30
      %v973 = vmax.f32 %v965, %v969
      %v974 = vmax.f32 %v966, %v970
      %v975 = vmax.f32 %v967, %v971
      %v976 = vmax.f32 %v968, %v972
      %v977 = vmax.f32 %v973, %v974
      %v978 = vmax.f32 %v975, %v976
      %v979 = vmax.f32 %v977, %v978
      %v980 = vrot.slane %v979, 4
      %v981 = vmax.f32 %v979, %v980
      %v982 = vrot.slane %v981, 2
      %v983 = vmax.f32 %v981, %v982
      %v984 = vrot.slane %v983, 1
      %v985 = vmax.f32 %v983, %v984
      %986 = vst [vmem:[#allocation2 + $0x2] sm:$0x1] %v985
      %vm987 = vcmp.eq.s32.totalorder %v280, 3
      %vm988 = vcmp.eq.s32.totalorder %v281, 3
      %vm989 = vcmp.eq.s32.totalorder %v282, 3
      %vm990 = vcmp.eq.s32.totalorder %v283, 3
      %vm991 = vcmp.eq.s32.totalorder %v284, 3
      %vm992 = vcmp.eq.s32.totalorder %v285, 3
      %vm993 = vcmp.eq.s32.totalorder %v286, 3
      %vm994 = vcmp.eq.s32.totalorder %v287, 3
      %v995 = vsel %vm987, 1, 0
      %v996 = vsel %vm988, 1, 0
      %v997 = vsel %vm989, 1, 0
      %v998 = vsel %vm990, 1, 0
      %v999 = vsel %vm991, 1, 0
      %v1000 = vsel %vm992, 1, 0
      %v1001 = vsel %vm993, 1, 0
      %v1002 = vsel %vm994, 1, 0
      %1003 = vset.pattern.permute.xlu0 0
      %1004 = vperm.xlu0 %1003, %v995
      %v1005 = vpop.permute.xlu0 %1004
      %1006 = vset.pattern.permute.xlu0 0
      %1007 = vperm.xlu0 %1006, %v996
      %v1008 = vpop.permute.xlu0 %1007
      %1009 = vset.pattern.permute.xlu0 0
      %1010 = vperm.xlu0 %1009, %v997
      %v1011 = vpop.permute.xlu0 %1010
      %1012 = vset.pattern.permute.xlu0 0
      %1013 = vperm.xlu0 %1012, %v998
      %v1014 = vpop.permute.xlu0 %1013
      %1015 = vset.pattern.permute.xlu0 0
      %1016 = vperm.xlu0 %1015, %v999
      %v1017 = vpop.permute.xlu0 %1016
      %1018 = vset.pattern.permute.xlu0 0
      %1019 = vperm.xlu0 %1018, %v1000
      %v1020 = vpop.permute.xlu0 %1019
      %1021 = vset.pattern.permute.xlu0 0
      %1022 = vperm.xlu0 %1021, %v1001
      %v1023 = vpop.permute.xlu0 %1022
      %1024 = vset.pattern.permute.xlu0 0
      %1025 = vperm.xlu0 %1024, %v1002
      %v1026 = vpop.permute.xlu0 %1025
      %vm1027 = vcmp.eq.s32.totalorder %v1005, 1
      %vm1028 = vcmp.eq.s32.totalorder %v1008, 1
      %vm1029 = vcmp.eq.s32.totalorder %v1011, 1
      %vm1030 = vcmp.eq.s32.totalorder %v1014, 1
      %vm1031 = vcmp.eq.s32.totalorder %v1017, 1
      %vm1032 = vcmp.eq.s32.totalorder %v1020, 1
      %vm1033 = vcmp.eq.s32.totalorder %v1023, 1
      %vm1034 = vcmp.eq.s32.totalorder %v1026, 1
      %v1035 = vsel %vm1027, %v769, -1e+30
      %v1036 = vsel %vm1028, %v770, -1e+30
      %v1037 = vsel %vm1029, %v771, -1e+30
      %v1038 = vsel %vm1030, %v772, -1e+30
      %v1039 = vsel %vm1031, %v773, -1e+30
      %v1040 = vsel %vm1032, %v774, -1e+30
      %v1041 = vsel %vm1033, %v775, -1e+30
      %v1042 = vsel %vm1034, %v776, -1e+30
      %v1043 = vmax.f32 %v1035, %v1039
      %v1044 = vmax.f32 %v1036, %v1040
      %v1045 = vmax.f32 %v1037, %v1041
      %v1046 = vmax.f32 %v1038, %v1042
      %v1047 = vmax.f32 %v1043, %v1044
      %v1048 = vmax.f32 %v1045, %v1046
      %v1049 = vmax.f32 %v1047, %v1048
      %v1050 = vrot.slane %v1049, 4
      %v1051 = vmax.f32 %v1049, %v1050
      %v1052 = vrot.slane %v1051, 2
      %v1053 = vmax.f32 %v1051, %v1052
      %v1054 = vrot.slane %v1053, 1
      %v1055 = vmax.f32 %v1053, %v1054
      %1056 = vst [vmem:[#allocation2 + $0x3] sm:$0x1] %v1055
      %vm1057 = vcmp.eq.s32.totalorder %v280, 4
      %vm1058 = vcmp.eq.s32.totalorder %v281, 4
      %vm1059 = vcmp.eq.s32.totalorder %v282, 4
      %vm1060 = vcmp.eq.s32.totalorder %v283, 4
      %vm1061 = vcmp.eq.s32.totalorder %v284, 4
      %vm1062 = vcmp.eq.s32.totalorder %v285, 4
      %vm1063 = vcmp.eq.s32.totalorder %v286, 4
      %vm1064 = vcmp.eq.s32.totalorder %v287, 4
      %v1065 = vsel %vm1057, 1, 0
      %v1066 = vsel %vm1058, 1, 0
      %v1067 = vsel %vm1059, 1, 0
      %v1068 = vsel %vm1060, 1, 0
      %v1069 = vsel %vm1061, 1, 0
      %v1070 = vsel %vm1062, 1, 0
      %v1071 = vsel %vm1063, 1, 0
      %v1072 = vsel %vm1064, 1, 0
      %1073 = vset.pattern.permute.xlu0 0
      %1074 = vperm.xlu0 %1073, %v1065
      %v1075 = vpop.permute.xlu0 %1074
      %1076 = vset.pattern.permute.xlu0 0
      %1077 = vperm.xlu0 %1076, %v1066
      %v1078 = vpop.permute.xlu0 %1077
      %1079 = vset.pattern.permute.xlu0 0
      %1080 = vperm.xlu0 %1079, %v1067
      %v1081 = vpop.permute.xlu0 %1080
      %1082 = vset.pattern.permute.xlu0 0
      %1083 = vperm.xlu0 %1082, %v1068
      %v1084 = vpop.permute.xlu0 %1083
      %1085 = vset.pattern.permute.xlu0 0
      %1086 = vperm.xlu0 %1085, %v1069
      %v1087 = vpop.permute.xlu0 %1086
      %1088 = vset.pattern.permute.xlu0 0
      %1089 = vperm.xlu0 %1088, %v1070
      %v1090 = vpop.permute.xlu0 %1089
      %1091 = vset.pattern.permute.xlu0 0
      %1092 = vperm.xlu0 %1091, %v1071
      %v1093 = vpop.permute.xlu0 %1092
      %1094 = vset.pattern.permute.xlu0 0
      %1095 = vperm.xlu0 %1094, %v1072
      %v1096 = vpop.permute.xlu0 %1095
      %vm1097 = vcmp.eq.s32.totalorder %v1075, 1
      %vm1098 = vcmp.eq.s32.totalorder %v1078, 1
      %vm1099 = vcmp.eq.s32.totalorder %v1081, 1
      %vm1100 = vcmp.eq.s32.totalorder %v1084, 1
      %vm1101 = vcmp.eq.s32.totalorder %v1087, 1
      %vm1102 = vcmp.eq.s32.totalorder %v1090, 1
      %vm1103 = vcmp.eq.s32.totalorder %v1093, 1
      %vm1104 = vcmp.eq.s32.totalorder %v1096, 1
      %v1105 = vsel %vm1097, %v769, -1e+30
      %v1106 = vsel %vm1098, %v770, -1e+30
      %v1107 = vsel %vm1099, %v771, -1e+30
      %v1108 = vsel %vm1100, %v772, -1e+30
      %v1109 = vsel %vm1101, %v773, -1e+30
      %v1110 = vsel %vm1102, %v774, -1e+30
      %v1111 = vsel %vm1103, %v775, -1e+30
      %v1112 = vsel %vm1104, %v776, -1e+30
      %v1113 = vmax.f32 %v1105, %v1109
      %v1114 = vmax.f32 %v1106, %v1110
      %v1115 = vmax.f32 %v1107, %v1111
      %v1116 = vmax.f32 %v1108, %v1112
      %v1117 = vmax.f32 %v1113, %v1114
      %v1118 = vmax.f32 %v1115, %v1116
      %v1119 = vmax.f32 %v1117, %v1118
      %v1120 = vrot.slane %v1119, 4
      %v1121 = vmax.f32 %v1119, %v1120
      %v1122 = vrot.slane %v1121, 2
      %v1123 = vmax.f32 %v1121, %v1122
      %v1124 = vrot.slane %v1123, 1
      %v1125 = vmax.f32 %v1123, %v1124
      %1126 = vst [vmem:[#allocation2 + $0x4] sm:$0x1] %v1125
      %vm1127 = vcmp.eq.s32.totalorder %v280, 5
      %vm1128 = vcmp.eq.s32.totalorder %v281, 5
      %vm1129 = vcmp.eq.s32.totalorder %v282, 5
      %vm1130 = vcmp.eq.s32.totalorder %v283, 5
      %vm1131 = vcmp.eq.s32.totalorder %v284, 5
      %vm1132 = vcmp.eq.s32.totalorder %v285, 5
      %vm1133 = vcmp.eq.s32.totalorder %v286, 5
      %vm1134 = vcmp.eq.s32.totalorder %v287, 5
      %v1135 = vsel %vm1127, 1, 0
      %v1136 = vsel %vm1128, 1, 0
      %v1137 = vsel %vm1129, 1, 0
      %v1138 = vsel %vm1130, 1, 0
      %v1139 = vsel %vm1131, 1, 0
      %v1140 = vsel %vm1132, 1, 0
      %v1141 = vsel %vm1133, 1, 0
      %v1142 = vsel %vm1134, 1, 0
      %1143 = vset.pattern.permute.xlu0 0
      %1144 = vperm.xlu0 %1143, %v1135
      %v1145 = vpop.permute.xlu0 %1144
      %1146 = vset.pattern.permute.xlu0 0
      %1147 = vperm.xlu0 %1146, %v1136
      %v1148 = vpop.permute.xlu0 %1147
      %1149 = vset.pattern.permute.xlu0 0
      %1150 = vperm.xlu0 %1149, %v1137
      %v1151 = vpop.permute.xlu0 %1150
      %1152 = vset.pattern.permute.xlu0 0
      %1153 = vperm.xlu0 %1152, %v1138
      %v1154 = vpop.permute.xlu0 %1153
      %1155 = vset.pattern.permute.xlu0 0
      %1156 = vperm.xlu0 %1155, %v1139
      %v1157 = vpop.permute.xlu0 %1156
      %1158 = vset.pattern.permute.xlu0 0
      %1159 = vperm.xlu0 %1158, %v1140
      %v1160 = vpop.permute.xlu0 %1159
      %1161 = vset.pattern.permute.xlu0 0
      %1162 = vperm.xlu0 %1161, %v1141
      %v1163 = vpop.permute.xlu0 %1162
      %1164 = vset.pattern.permute.xlu0 0
      %1165 = vperm.xlu0 %1164, %v1142
      %v1166 = vpop.permute.xlu0 %1165
      %vm1167 = vcmp.eq.s32.totalorder %v1145, 1
      %vm1168 = vcmp.eq.s32.totalorder %v1148, 1
      %vm1169 = vcmp.eq.s32.totalorder %v1151, 1
      %vm1170 = vcmp.eq.s32.totalorder %v1154, 1
      %vm1171 = vcmp.eq.s32.totalorder %v1157, 1
      %vm1172 = vcmp.eq.s32.totalorder %v1160, 1
      %vm1173 = vcmp.eq.s32.totalorder %v1163, 1
      %vm1174 = vcmp.eq.s32.totalorder %v1166, 1
      %v1175 = vsel %vm1167, %v769, -1e+30
      %v1176 = vsel %vm1168, %v770, -1e+30
      %v1177 = vsel %vm1169, %v771, -1e+30
      %v1178 = vsel %vm1170, %v772, -1e+30
      %v1179 = vsel %vm1171, %v773, -1e+30
      %v1180 = vsel %vm1172, %v774, -1e+30
      %v1181 = vsel %vm1173, %v775, -1e+30
      %v1182 = vsel %vm1174, %v776, -1e+30
      %v1183 = vmax.f32 %v1175, %v1179
      %v1184 = vmax.f32 %v1176, %v1180
      %v1185 = vmax.f32 %v1177, %v1181
      %v1186 = vmax.f32 %v1178, %v1182
      %v1187 = vmax.f32 %v1183, %v1184
      %v1188 = vmax.f32 %v1185, %v1186
      %v1189 = vmax.f32 %v1187, %v1188
      %v1190 = vrot.slane %v1189, 4
      %v1191 = vmax.f32 %v1189, %v1190
      %v1192 = vrot.slane %v1191, 2
      %v1193 = vmax.f32 %v1191, %v1192
      %v1194 = vrot.slane %v1193, 1
      %v1195 = vmax.f32 %v1193, %v1194
      %1196 = vst [vmem:[#allocation2 + $0x5] sm:$0x1] %v1195
      %vm1197 = vcmp.eq.s32.totalorder %v280, 6
      %vm1198 = vcmp.eq.s32.totalorder %v281, 6
      %vm1199 = vcmp.eq.s32.totalorder %v282, 6
      %vm1200 = vcmp.eq.s32.totalorder %v283, 6
      %vm1201 = vcmp.eq.s32.totalorder %v284, 6
      %vm1202 = vcmp.eq.s32.totalorder %v285, 6
      %vm1203 = vcmp.eq.s32.totalorder %v286, 6
      %vm1204 = vcmp.eq.s32.totalorder %v287, 6
      %v1205 = vsel %vm1197, 1, 0
      %v1206 = vsel %vm1198, 1, 0
      %v1207 = vsel %vm1199, 1, 0
      %v1208 = vsel %vm1200, 1, 0
      %v1209 = vsel %vm1201, 1, 0
      %v1210 = vsel %vm1202, 1, 0
      %v1211 = vsel %vm1203, 1, 0
      %v1212 = vsel %vm1204, 1, 0
      %1213 = vset.pattern.permute.xlu0 0
      %1214 = vperm.xlu0 %1213, %v1205
      %v1215 = vpop.permute.xlu0 %1214
      %1216 = vset.pattern.permute.xlu0 0
      %1217 = vperm.xlu0 %1216, %v1206
      %v1218 = vpop.permute.xlu0 %1217
      %1219 = vset.pattern.permute.xlu0 0
      %1220 = vperm.xlu0 %1219, %v1207
      %v1221 = vpop.permute.xlu0 %1220
      %1222 = vset.pattern.permute.xlu0 0
      %1223 = vperm.xlu0 %1222, %v1208
      %v1224 = vpop.permute.xlu0 %1223
      %1225 = vset.pattern.permute.xlu0 0
      %1226 = vperm.xlu0 %1225, %v1209
      %v1227 = vpop.permute.xlu0 %1226
      %1228 = vset.pattern.permute.xlu0 0
      %1229 = vperm.xlu0 %1228, %v1210
      %v1230 = vpop.permute.xlu0 %1229
      %1231 = vset.pattern.permute.xlu0 0
      %1232 = vperm.xlu0 %1231, %v1211
      %v1233 = vpop.permute.xlu0 %1232
      %1234 = vset.pattern.permute.xlu0 0
      %1235 = vperm.xlu0 %1234, %v1212
      %v1236 = vpop.permute.xlu0 %1235
      %vm1237 = vcmp.eq.s32.totalorder %v1215, 1
      %vm1238 = vcmp.eq.s32.totalorder %v1218, 1
      %vm1239 = vcmp.eq.s32.totalorder %v1221, 1
      %vm1240 = vcmp.eq.s32.totalorder %v1224, 1
      %vm1241 = vcmp.eq.s32.totalorder %v1227, 1
      %vm1242 = vcmp.eq.s32.totalorder %v1230, 1
      %vm1243 = vcmp.eq.s32.totalorder %v1233, 1
      %vm1244 = vcmp.eq.s32.totalorder %v1236, 1
      %v1245 = vsel %vm1237, %v769, -1e+30
      %v1246 = vsel %vm1238, %v770, -1e+30
      %v1247 = vsel %vm1239, %v771, -1e+30
      %v1248 = vsel %vm1240, %v772, -1e+30
      %v1249 = vsel %vm1241, %v773, -1e+30
      %v1250 = vsel %vm1242, %v774, -1e+30
      %v1251 = vsel %vm1243, %v775, -1e+30
      %v1252 = vsel %vm1244, %v776, -1e+30
      %v1253 = vmax.f32 %v1245, %v1249
      %v1254 = vmax.f32 %v1246, %v1250
      %v1255 = vmax.f32 %v1247, %v1251
      %v1256 = vmax.f32 %v1248, %v1252
      %v1257 = vmax.f32 %v1253, %v1254
      %v1258 = vmax.f32 %v1255, %v1256
      %v1259 = vmax.f32 %v1257, %v1258
      %v1260 = vrot.slane %v1259, 4
      %v1261 = vmax.f32 %v1259, %v1260
      %v1262 = vrot.slane %v1261, 2
      %v1263 = vmax.f32 %v1261, %v1262
      %v1264 = vrot.slane %v1263, 1
      %v1265 = vmax.f32 %v1263, %v1264
      %1266 = vst [vmem:[#allocation2 + $0x6] sm:$0x1] %v1265
      %vm1267 = vcmp.eq.s32.totalorder %v280, 7
      %vm1268 = vcmp.eq.s32.totalorder %v281, 7
      %vm1269 = vcmp.eq.s32.totalorder %v282, 7
      %vm1270 = vcmp.eq.s32.totalorder %v283, 7
      %vm1271 = vcmp.eq.s32.totalorder %v284, 7
      %vm1272 = vcmp.eq.s32.totalorder %v285, 7
      %vm1273 = vcmp.eq.s32.totalorder %v286, 7
      %vm1274 = vcmp.eq.s32.totalorder %v287, 7
      %v1275 = vsel %vm1267, 1, 0
      %v1276 = vsel %vm1268, 1, 0
      %v1277 = vsel %vm1269, 1, 0
      %v1278 = vsel %vm1270, 1, 0
      %v1279 = vsel %vm1271, 1, 0
      %v1280 = vsel %vm1272, 1, 0
      %v1281 = vsel %vm1273, 1, 0
      %v1282 = vsel %vm1274, 1, 0
      %1283 = vset.pattern.permute.xlu0 0
      %1284 = vperm.xlu0 %1283, %v1275
      %v1285 = vpop.permute.xlu0 %1284
      %1286 = vset.pattern.permute.xlu0 0
      %1287 = vperm.xlu0 %1286, %v1276
      %v1288 = vpop.permute.xlu0 %1287
      %1289 = vset.pattern.permute.xlu0 0
      %1290 = vperm.xlu0 %1289, %v1277
      %v1291 = vpop.permute.xlu0 %1290
      %1292 = vset.pattern.permute.xlu0 0
      %1293 = vperm.xlu0 %1292, %v1278
      %v1294 = vpop.permute.xlu0 %1293
      %1295 = vset.pattern.permute.xlu0 0
      %1296 = vperm.xlu0 %1295, %v1279
      %v1297 = vpop.permute.xlu0 %1296
      %1298 = vset.pattern.permute.xlu0 0
      %1299 = vperm.xlu0 %1298, %v1280
      %v1300 = vpop.permute.xlu0 %1299
      %1301 = vset.pattern.permute.xlu0 0
      %1302 = vperm.xlu0 %1301, %v1281
      %v1303 = vpop.permute.xlu0 %1302
      %1304 = vset.pattern.permute.xlu0 0
      %1305 = vperm.xlu0 %1304, %v1282
      %v1306 = vpop.permute.xlu0 %1305
      %vm1307 = vcmp.eq.s32.totalorder %v1285, 1
      %vm1308 = vcmp.eq.s32.totalorder %v1288, 1
      %vm1309 = vcmp.eq.s32.totalorder %v1291, 1
      %vm1310 = vcmp.eq.s32.totalorder %v1294, 1
      %vm1311 = vcmp.eq.s32.totalorder %v1297, 1
      %vm1312 = vcmp.eq.s32.totalorder %v1300, 1
      %vm1313 = vcmp.eq.s32.totalorder %v1303, 1
      %vm1314 = vcmp.eq.s32.totalorder %v1306, 1
      %v1315 = vsel %vm1307, %v769, -1e+30
      %v1316 = vsel %vm1308, %v770, -1e+30
      %v1317 = vsel %vm1309, %v771, -1e+30
      %v1318 = vsel %vm1310, %v772, -1e+30
      %v1319 = vsel %vm1311, %v773, -1e+30
      %v1320 = vsel %vm1312, %v774, -1e+30
      %v1321 = vsel %vm1313, %v775, -1e+30
      %v1322 = vsel %vm1314, %v776, -1e+30
      %v1323 = vmax.f32 %v1315, %v1319
      %v1324 = vmax.f32 %v1316, %v1320
      %v1325 = vmax.f32 %v1317, %v1321
      %v1326 = vmax.f32 %v1318, %v1322
      %v1327 = vmax.f32 %v1323, %v1324
      %v1328 = vmax.f32 %v1325, %v1326
      %v1329 = vmax.f32 %v1327, %v1328
      %v1330 = vrot.slane %v1329, 4
      %v1331 = vmax.f32 %v1329, %v1330
      %v1332 = vrot.slane %v1331, 2
      %v1333 = vmax.f32 %v1331, %v1332
      %v1334 = vrot.slane %v1333, 1
      %v1335 = vmax.f32 %v1333, %v1334
      %1336 = vst [vmem:[#allocation2 + $0x7] sm:$0x1] %v1335
      %v1337 = vld [vmem:[#allocation2] sm:$0xff]
      %v1338 = vpack.c.bf16 %v1337, %v1337
      %s1339 = scalar_lea.vmem %s3, 128
      %v1340 = vld [vmem:[%s1339] sm:$0xf]
      %v1341 = vld [vmem:[%s1339 + $0x4] sm:$0xf]
      %v1342 = vld [vmem:[%s1339 + $0x8] sm:$0xf]
      %v1343 = vld [vmem:[%s1339 + $0xc] sm:$0xf]
      %v1344 = vld [vmem:[%s1339 + $0x10] sm:$0xf]
      %v1345 = vld [vmem:[%s1339 + $0x14] sm:$0xf]
      %v1346 = vld [vmem:[%s1339 + $0x18] sm:$0xf]
      %v1347 = vld [vmem:[%s1339 + $0x1c] sm:$0xf]
      %v1348 = vld [vmem:[%s1339 + $0x20] sm:$0xf]
      %v1349 = vld [vmem:[%s1339 + $0x24] sm:$0xf]
      %v1350 = vld [vmem:[%s1339 + $0x28] sm:$0xf]
      %v1351 = vld [vmem:[%s1339 + $0x2c] sm:$0xf]
      %v1352 = vld [vmem:[%s1339 + $0x30] sm:$0xf]
      %v1353 = vld [vmem:[%s1339 + $0x34] sm:$0xf]
      %v1354 = vld [vmem:[%s1339 + $0x38] sm:$0xf]
      %v1355 = vld [vmem:[%s1339 + $0x3c] sm:$0xf]
      %s1356 = scalar_lea.vmem %s4, 2
      %v1357 = vld [vmem:[%s1356] sm:$0x1]
      %v1359 = vlaneseq
      %v1360 = vshrl.u32 %v1359, 7
      %v1361 = vsub.s32 0, %v1360
      %v1362 = vrot.slane %v1357, %v1361
      %v1380 = vunpack.c.l.b16 %v1340
      %v1381 = vunpack.c.l.b16 %v1341
      %v1382 = vunpack.c.l.b16 %v1342
      %v1383 = vunpack.c.l.b16 %v1343
      %v1384 = vunpack.c.l.b16 %v1344
      %v1385 = vunpack.c.l.b16 %v1345
      %v1386 = vunpack.c.l.b16 %v1346
      %v1387 = vunpack.c.l.b16 %v1347
      %v1388 = vunpack.c.l.b16 %v1348
      %v1389 = vunpack.c.l.b16 %v1349
      %v1390 = vunpack.c.l.b16 %v1350
      %v1391 = vunpack.c.l.b16 %v1351
      %v1392 = vunpack.c.l.b16 %v1352
      %v1393 = vunpack.c.l.b16 %v1353
      %v1394 = vunpack.c.l.b16 %v1354
      %v1395 = vunpack.c.l.b16 %v1355
      %v1396 = vpack.c.b16 %v1381, %v1380
      %v1397 = vpack.c.b16 %v1383, %v1382
      %v1398 = vpack.c.b16 %v1385, %v1384
      %v1399 = vpack.c.b16 %v1387, %v1386
      %v1400 = vpack.c.b16 %v1389, %v1388
      %v1401 = vpack.c.b16 %v1391, %v1390
      %v1402 = vpack.c.b16 %v1393, %v1392
      %v1403 = vpack.c.b16 %v1395, %v1394
      %1412 = vmatprep.subr.bf16.mxu0 0
      %1413 = vmatpush1.bf16.msra.mxu0 %v1403
      %1414 = vmatprep.subr.bf16.mxu0 0
      %1415 = vmatpush1.bf16.msra.mxu0 %v1402
      %1416 = vmatprep.subr.bf16.mxu0 0
      %1417 = vmatpush1.bf16.msra.mxu0 %v1401
      %1418 = vmatprep.subr.bf16.mxu0 0
      %1419 = vmatpush1.bf16.msra.mxu0 %v1400
      %1420 = vmatprep.subr.bf16.mxu0 0
      %1421 = vmatpush1.bf16.msra.mxu0 %v1399
      %1422 = vmatprep.subr.bf16.mxu0 0
      %1423 = vmatpush1.bf16.msra.mxu0 %v1398
      %1424 = vmatprep.subr.bf16.mxu0 0
      %1425 = vmatpush1.bf16.msra.mxu0 %v1397
      %1426 = vmatprep.subr.bf16.mxu0 0
      %1427 = vmatpush1.bf16.msra.mxu0 %v1396
      %1428 = vmatprep.subr.bf16.mxu0 0
      %1429 = vmatpush2.bf16.msra.mxu0 0
      %1430 = vmatprep.subr.bf16.mxu0 0
      %1431 = vmatpush2.bf16.msra.mxu0 0
      %1432 = vmatprep.subr.bf16.mxu0 0
      %1433 = vmatpush2.bf16.msra.mxu0 0
      %1434 = vmatprep.subr.bf16.mxu0 0
      %1435 = vmatpush2.bf16.msra.mxu0 0
      %1436 = vmatprep.subr.bf16.mxu0 0
      %1437 = vmatpush2.bf16.msra.mxu0 0
      %1438 = vmatprep.subr.bf16.mxu0 0
      %1439 = vmatpush2.bf16.msra.mxu0 0
      %1440 = vmatprep.subr.bf16.mxu0 0
      %1441 = vmatpush2.bf16.msra.mxu0 0
      %1442 = vmatprep.subr.bf16.mxu0 0
      %1443 = vmatpush2.bf16.msra.mxu0 0
      %1444 = vmatprep.mubr.bf16.mxu0 0
      %1445 = vmatmul.mubr.bf16.gmra.mxu0 %v1338
      %v1446 = vpop.f32.mrf.mxu0
      %v1447 = vadd.f32 %v1362, %v1446
      %v1448 = vpop.f32.mrf.mxu0
      %v1449 = vpop.f32.mrf.mxu0
      %v1450 = vpop.f32.mrf.mxu0
      %1451 = vdwg.mxu0
      %v1452 = vmax.f32 %v1447, 0.0
      %v1453 = vpack.c.bf16 %v1452, %v1452
      %s1454 = scalar_lea.vmem %s3, 192
      %v1455 = vld [vmem:[%s1454] sm:$0xf]
      %v1456 = vld [vmem:[%s1454 + $0x4] sm:$0xf]
      %v1457 = vld [vmem:[%s1454 + $0x8] sm:$0xf]
      %v1458 = vld [vmem:[%s1454 + $0xc] sm:$0xf]
      %v1459 = vld [vmem:[%s1454 + $0x10] sm:$0xf]
      %v1460 = vld [vmem:[%s1454 + $0x14] sm:$0xf]
      %v1461 = vld [vmem:[%s1454 + $0x18] sm:$0xf]
      %v1462 = vld [vmem:[%s1454 + $0x1c] sm:$0xf]
      %v1463 = vld [vmem:[%s1454 + $0x20] sm:$0xf]
      %v1464 = vld [vmem:[%s1454 + $0x24] sm:$0xf]
      %v1465 = vld [vmem:[%s1454 + $0x28] sm:$0xf]
      %v1466 = vld [vmem:[%s1454 + $0x2c] sm:$0xf]
      %v1467 = vld [vmem:[%s1454 + $0x30] sm:$0xf]
      %v1468 = vld [vmem:[%s1454 + $0x34] sm:$0xf]
      %v1469 = vld [vmem:[%s1454 + $0x38] sm:$0xf]
      %v1470 = vld [vmem:[%s1454 + $0x3c] sm:$0xf]
      %s1471 = scalar_lea.vmem %s4, 3
      %v1472 = vld [vmem:[%s1471] sm:$0x1]
      %v1474 = vlaneseq
      %v1475 = vshrl.u32 %v1474, 7
      %v1476 = vsub.s32 0, %v1475
      %v1477 = vrot.slane %v1472, %v1476
      %v1495 = vunpack.c.l.b16 %v1455
      %v1496 = vunpack.c.l.b16 %v1456
      %v1497 = vunpack.c.l.b16 %v1457
      %v1498 = vunpack.c.l.b16 %v1458
      %v1499 = vunpack.c.l.b16 %v1459
      %v1500 = vunpack.c.l.b16 %v1460
      %v1501 = vunpack.c.l.b16 %v1461
      %v1502 = vunpack.c.l.b16 %v1462
      %v1503 = vunpack.c.l.b16 %v1463
      %v1504 = vunpack.c.l.b16 %v1464
      %v1505 = vunpack.c.l.b16 %v1465
      %v1506 = vunpack.c.l.b16 %v1466
      %v1507 = vunpack.c.l.b16 %v1467
      %v1508 = vunpack.c.l.b16 %v1468
      %v1509 = vunpack.c.l.b16 %v1469
      %v1510 = vunpack.c.l.b16 %v1470
      %v1511 = vpack.c.b16 %v1496, %v1495
      %v1512 = vpack.c.b16 %v1498, %v1497
      %v1513 = vpack.c.b16 %v1500, %v1499
      %v1514 = vpack.c.b16 %v1502, %v1501
      %v1515 = vpack.c.b16 %v1504, %v1503
      %v1516 = vpack.c.b16 %v1506, %v1505
      %v1517 = vpack.c.b16 %v1508, %v1507
      %v1518 = vpack.c.b16 %v1510, %v1509
      %1527 = vmatprep.subr.bf16.mxu0 0
      %1528 = vmatpush1.bf16.msra.mxu0 %v1518
      %1529 = vmatprep.subr.bf16.mxu0 0
      %1530 = vmatpush1.bf16.msra.mxu0 %v1517
      %1531 = vmatprep.subr.bf16.mxu0 0
      %1532 = vmatpush1.bf16.msra.mxu0 %v1516
      %1533 = vmatprep.subr.bf16.mxu0 0
      %1534 = vmatpush1.bf16.msra.mxu0 %v1515
      %1535 = vmatprep.subr.bf16.mxu0 0
      %1536 = vmatpush1.bf16.msra.mxu0 %v1514
      %1537 = vmatprep.subr.bf16.mxu0 0
      %1538 = vmatpush1.bf16.msra.mxu0 %v1513
      %1539 = vmatprep.subr.bf16.mxu0 0
      %1540 = vmatpush1.bf16.msra.mxu0 %v1512
      %1541 = vmatprep.subr.bf16.mxu0 0
      %1542 = vmatpush1.bf16.msra.mxu0 %v1511
      %1543 = vmatprep.subr.bf16.mxu0 0
      %1544 = vmatpush2.bf16.msra.mxu0 0
      %1545 = vmatprep.subr.bf16.mxu0 0
      %1546 = vmatpush2.bf16.msra.mxu0 0
      %1547 = vmatprep.subr.bf16.mxu0 0
      %1548 = vmatpush2.bf16.msra.mxu0 0
      %1549 = vmatprep.subr.bf16.mxu0 0
      %1550 = vmatpush2.bf16.msra.mxu0 0
      %1551 = vmatprep.subr.bf16.mxu0 0
      %1552 = vmatpush2.bf16.msra.mxu0 0
      %1553 = vmatprep.subr.bf16.mxu0 0
      %1554 = vmatpush2.bf16.msra.mxu0 0
      %1555 = vmatprep.subr.bf16.mxu0 0
      %1556 = vmatpush2.bf16.msra.mxu0 0
      %1557 = vmatprep.subr.bf16.mxu0 0
      %1558 = vmatpush2.bf16.msra.mxu0 0
      %1559 = vmatprep.mubr.bf16.mxu0 0
      %1560 = vmatmul.mubr.bf16.gmra.mxu0 %v1453
      %v1561 = vpop.f32.mrf.mxu0
      %v1562 = vadd.f32 %v1477, %v1561
      %v1563 = vpop.f32.mrf.mxu0
      %v1564 = vpop.f32.mrf.mxu0
      %v1565 = vpop.f32.mrf.mxu0
      %1566 = vdwg.mxu0
      %1567 = vst [vmem:[%s262] sm:$0xff] %v1562
      %p1568 = scmp.lt.s32.totalorder %s16, 1
      %s1569 = scalar_select %p1568, %s16, 1
      %s1570 = smul.addr %s1569, 8
      %s1571 = scalar_lea.vmem %s5, %s1570
      // Predicated region
      $region41: #{drugnet_forward.1} parent=39 // pred_check
        %p1572 = pneg %p154
      $region42: #{drugnet_forward.1} parent=39 // pred_check_branch
        %1574 = sbr.rel (%p1572) target = $region44
      $region43: #{drugnet_forward.1} parent=39 // pred_region
        _
      $region44: #{drugnet_forward.1} parent=39 // pred_fallthru
        _
    $region40: #{drugnet_forward.1} parent=5 // pred_fallthru
      _
    %p1575 = scmp.le.s32.totalorder 2, %s11
    // Predicated region
    $region45: #{drugnet_forward.1} parent=5 // pred_check
      %p1576 = pneg %p1575
    $region46: #{drugnet_forward.1} parent=5 // pred_check_branch
      %1578 = sbr.rel (%p1576) target = $region48
    $region47: #{drugnet_forward.1} parent=5 // pred_region
      %s1579 = ssub.s32 %s11, 2
      // Predicated region
      $region49: #{drugnet_forward.1} parent=47 // pred_check
        %p1580 = pneg %p160
      $region50: #{drugnet_forward.1} parent=47 // pred_check_branch
        %1582 = sbr.rel (%p1580) target = $region52
      $region51: #{drugnet_forward.1} parent=47 // pred_region
        %p1583 = scmp.lt.s32.totalorder %s17, 1
        %s1584 = scalar_select %p1583, %s17, 1
        %s1585 = smul.addr %s1584, 8
        %s1586 = scalar_lea.vmem %s5, %s1585
      $region52: #{drugnet_forward.1} parent=47 // pred_fallthru
        _
    $region48: #{drugnet_forward.1} parent=5 // pred_fallthru
      _
  $region6: #{drugnet_forward.1} parent=0 // loop_footer
    %s15 = sadd.s32 1, %s11
  $region7: #{drugnet_forward.1} parent=0 // loop_footer_branch
    %10 = sbr.rel target = $region3
  $region8: #{drugnet_forward.1} parent=0 // loop_exit
    _

</llo_original>
